<compile_context>
chip_gen: v6e
topology: v6e:2x2x1
jax: 0.10.0
libtpu: 0.0.40
codegen_flags: <defaults>
</compile_context>

<pallas_src>
import jax
import jax.numpy as jnp
from jax.experimental import pallas as pl
from jax.experimental.pallas import tpu as pltpu

HIDDEN = 1024          # width of the two hidden layers
TK = 512               # layer-2 reduction tile -> 2 grid steps (mult. of 256)
NUM_K = HIDDEN // TK


def _softplus(v):
    # Numerically stable softplus using only exp/log (safe Mosaic lowering).
    return jnp.maximum(v, 0.0) + jnp.log(1.0 + jnp.exp(-jnp.abs(v)))


def _mi_kernel(x_ref, w1_ref, b1_ref, w2_ref, b2_ref, w3t_ref, b3_ref,
               out_ref, h1_ref, acc_ref):
    k = pl.program_id(0)

    # Layer 1 runs once (k == 0): full (2B, HIDDEN) activation into bf16 scratch,
    # pre-split into NUM_K lane slabs so the k loop uses a leading-axis index.
    @pl.when(k == 0)
    def _layer1():
        h1 = jnp.dot(x_ref[...], w1_ref[...],
                     preferred_element_type=jnp.float32) + b1_ref[...]
        h1 = jnp.maximum(h1, 0.0).astype(jnp.bfloat16)
        for kk in range(NUM_K):
            h1_ref[kk] = h1[:, kk * TK:(kk + 1) * TK]

    # Layer 2 partial for this slab, accumulated in f32 on the MXU.
    partial = jnp.dot(h1_ref[k], w2_ref[...],
                      preferred_element_type=jnp.float32)

    @pl.when(k == 0)
    def _first():
        acc_ref[...] = partial              # no zero-init / b2 broadcast needed

    @pl.when(k != 0)
    def _rest():
        acc_ref[...] += partial

    @pl.when(k == pl.num_programs(0) - 1)
    def _finalize():
        h2 = jnp.maximum(acc_ref[...] + b2_ref[...], 0.0)        # b2 folded here
        # Layer 3 (out_features = 1): multiply + lane reduce instead of a
        # (1024, 128)-padded MXU matmul.
        logits = jnp.sum(h2 * w3t_ref[...], axis=-1, keepdims=True) + b3_ref[0, 0]
        b = logits.shape[0] // 2
        pos = logits[:b]
        neg = logits[b:]
        out_ref[0, 0] = -jnp.mean(_softplus(-pos)) - jnp.mean(_softplus(neg))
        # exp(neg) on raw logits matches the reference MINE formulation (can be
        # numerically fragile for large negative-pair logits, as in the original).
        out_ref[0, 1] = jnp.mean(pos) - jnp.mean(jnp.exp(neg)) + 1.0


@jax.jit
def mi_estimator_forward(x1, x2, params):
    """Reproduces MIEstimator.forward(x1, x2); returns (grad_term, est_term)."""
    w1, b1, w2, b2, w3t, b3 = params

    # pos input:  cat([x1, x2], 1) ; neg input: cat([roll(x1, 1, 0), x2], 1)
    x1_rolled = jnp.roll(x1, 1, axis=0)
    pos_in = jnp.concatenate([x1, x2], axis=1)
    neg_in = jnp.concatenate([x1_rolled, x2], axis=1)
    stacked = jnp.concatenate([pos_in, neg_in], axis=0).astype(jnp.bfloat16)

    n, d = stacked.shape

    smem_scalar = pl.BlockSpec((1, 1), lambda k: (0, 0),
                               memory_space=pltpu.MemorySpace.SMEM)

    out = pl.pallas_call(
        _mi_kernel,
        out_shape=jax.ShapeDtypeStruct((1, 2), jnp.float32),   # [grad, est]
        grid_spec=pltpu.PrefetchScalarGridSpec(
            num_scalar_prefetch=0,
            grid=(NUM_K,),
            in_specs=[
                pl.BlockSpec((n, d), lambda k: (0, 0)),           # stacked x (resident)
                pl.BlockSpec((d, HIDDEN), lambda k: (0, 0)),      # w1 (resident, 1 DMA)
                pl.BlockSpec((1, HIDDEN), lambda k: (0, 0)),      # b1 (resident)
                pl.BlockSpec((TK, HIDDEN), lambda k: (k, 0)),     # w2 row slab (pipelined)
                pl.BlockSpec((1, HIDDEN), lambda k: (0, 0)),      # b2 (resident)
                pl.BlockSpec((1, HIDDEN), lambda k: (0, 0)),      # w3^T (resident)
                smem_scalar,                                      # b3 scalar
            ],
            out_specs=pl.BlockSpec((1, 2), lambda k: (0, 0),
                                   memory_space=pltpu.MemorySpace.SMEM),
            scratch_shapes=[
                pltpu.VMEM((NUM_K, n, TK), jnp.bfloat16),   # full layer-1 activations
                pltpu.VMEM((n, HIDDEN), jnp.float32),       # layer-2 accumulator
            ],
        ),
        compiler_params=pltpu.CompilerParams(
            dimension_semantics=("arbitrary",),          # k axis is a reduction
            vmem_limit_bytes=16 * 1024 * 1024,           # fits every chip (incl. v7x)
        ),
    )(stacked, w1, b1, w2, b2, w3t, b3)
    # TODO(synk): for production batch sizes, add a leading "parallel" batch-block
    # grid axis (weight index_maps stay at (0, 0) so slabs aren't re-fetched) to
    # use both v7x TensorCores.
    return out[0, 0], out[0, 1]


def init_params(size1, size2, key):
    """PyTorch-style uniform(+-1/sqrt(fan_in)) init; heavy weights stored bf16."""
    d_in = size1 + size2
    ks = jax.random.split(key, 6)

    def lin(kw, kb, fan_in, fan_out):
        bound = float(fan_in) ** -0.5
        w = jax.random.uniform(kw, (fan_in, fan_out), jnp.float32, -bound, bound)
        b = jax.random.uniform(kb, (1, fan_out), jnp.float32, -bound, bound)
        return w, b

    w1, b1 = lin(ks[0], ks[1], d_in, HIDDEN)
    w2, b2 = lin(ks[2], ks[3], HIDDEN, HIDDEN)
    w3, b3 = lin(ks[4], ks[5], HIDDEN, 1)
    w3t = w3.T                                   # (1, HIDDEN), kept f32 (tiny)
    return (w1.astype(jnp.bfloat16), b1,
            w2.astype(jnp.bfloat16), b2,
            w3t, b3)                             # b3: (1, 1) f32


def _ref_forward(x1, x2, params):
    """Pure-JAX reference with the same bf16 weights / f32 accumulation."""
    w1, b1, w2, b2, w3t, b3 = params

    def mlp(xin):
        x = xin.astype(jnp.bfloat16)
        h1 = jnp.dot(x, w1, preferred_element_type=jnp.float32) + b1
        h1 = jnp.maximum(h1, 0.0).astype(jnp.bfloat16)
        h2 = jnp.dot(h1, w2, preferred_element_type=jnp.float32) + b2
        h2 = jnp.maximum(h2, 0.0)
        return jnp.sum(h2 * w3t, axis=-1, keepdims=True) + b3[0, 0]

    pos = mlp(jnp.concatenate([x1, x2], axis=1))
    neg = mlp(jnp.concatenate([jnp.roll(x1, 1, axis=0), x2], axis=1))
    grad = -jnp.mean(_softplus(-pos)) - jnp.mean(_softplus(neg))
    est = jnp.mean(pos) - jnp.mean(jnp.exp(neg)) + 1.0
    return grad, est


if __name__ == "__main__":
    key = jax.random.PRNGKey(0)
    k_p, k_x1, k_x2 = jax.random.split(key, 3)

    size1, size2, batch = 32, 32, 8

    params = init_params(size1, size2, k_p)
    x1 = jax.random.normal(k_x1, (batch, size1), jnp.float32)
    x2 = jax.random.normal(k_x2, (batch, size2), jnp.float32)

    grad_term, est_term = mi_estimator_forward(x1, x2, params)
    jax.block_until_ready((grad_term, est_term))

    ref_grad, ref_est = _ref_forward(x1, x2, params)
    assert jnp.allclose(grad_term, ref_grad, atol=1e-3, rtol=1e-3), (grad_term, ref_grad)
    assert jnp.allclose(est_term, ref_est, atol=1e-3, rtol=1e-3), (est_term, ref_est)

    print("KERNEL_OK")
</pallas_src>

<mosaic_0001>
module attributes {stable_mosaic.version = 11 : i64} {
  func.func @_mi_kernel(%arg0: i32, %arg1: memref<16x64xbf16, #tpu.memory_space<vmem>>, %arg2: memref<64x1024xbf16, #tpu.memory_space<vmem>>, %arg3: memref<1x1024xf32, #tpu.memory_space<vmem>>, %arg4: memref<512x1024xbf16, #tpu.memory_space<vmem>>, %arg5: memref<1x1024xf32, #tpu.memory_space<vmem>>, %arg6: memref<1x1024xf32, #tpu.memory_space<vmem>>, %arg7: memref<1x1xf32, #tpu.memory_space<smem>>, %arg8: memref<1x2xf32, #tpu.memory_space<smem>>, %arg9: memref<2x16x512xbf16, #tpu.memory_space<vmem>>, %arg10: memref<16x1024xf32, #tpu.memory_space<vmem>>) attributes {dimension_semantics = [#tpu.dimension_semantics<arbitrary>], iteration_bounds = array<i64: 2>, scalar_prefetch = 0 : i64, scratch_operands = 2 : i64, tpu.core_type = #tpu.core_type<tc>, window_params = [{pipeline_mode = #tpu.pipeline_mode<synchronous>, transform_indices = @transform_0, window_bounds = array<i64: 16, 64>}, {pipeline_mode = #tpu.pipeline_mode<synchronous>, transform_indices = @transform_1, window_bounds = array<i64: 64, 1024>}, {pipeline_mode = #tpu.pipeline_mode<synchronous>, transform_indices = @transform_2, window_bounds = array<i64: 1, 1024>}, {transform_indices = @transform_3, window_bounds = array<i64: 512, 1024>}, {pipeline_mode = #tpu.pipeline_mode<synchronous>, transform_indices = @transform_4, window_bounds = array<i64: 1, 1024>}, {pipeline_mode = #tpu.pipeline_mode<synchronous>, transform_indices = @transform_5, window_bounds = array<i64: 1, 1024>}, {transform_indices = @transform_6, window_bounds = array<i64: 1, 1>}, {transform_indices = @transform_7, window_bounds = array<i64: 1, 2>}]} {
    %c0_i32 = arith.constant 0 : i32
    %0 = arith.cmpi eq, %arg0, %c0_i32 : i32
    %1 = arith.extui %0 : i1 to i32
    %c0_i32_0 = arith.constant 0 : i32
    %2 = arith.cmpi ne, %1, %c0_i32_0 : i32
    scf.if %2 {
      %c0_9 = arith.constant 0 : index
      %c0_10 = arith.constant 0 : index
      %17 = vector.load %arg1[%c0_9, %c0_10] : memref<16x64xbf16, #tpu.memory_space<vmem>>, vector<16x64xbf16>
      %c0_11 = arith.constant 0 : index
      %c0_12 = arith.constant 0 : index
      %18 = vector.load %arg2[%c0_11, %c0_12] : memref<64x1024xbf16, #tpu.memory_space<vmem>>, vector<64x1024xbf16>
      %cst_13 = arith.constant dense<0.000000e+00> : vector<16x1024xf32>
      %19 = tpu.matmul %17, %18, %cst_13 {dimension_numbers = #tpu.dot_dimension_numbers<[1], [0], [0], [1], [0, 0, 1, 1], [], []>} : vector<16x64xbf16>, vector<64x1024xbf16>, vector<16x1024xf32> -> vector<16x1024xf32>
      %c0_14 = arith.constant 0 : index
      %c0_15 = arith.constant 0 : index
      %20 = vector.load %arg3[%c0_14, %c0_15] : memref<1x1024xf32, #tpu.memory_space<vmem>>, vector<1x1024xf32>
      %21 = vector.broadcast %20 : vector<1x1024xf32> to vector<16x1024xf32>
      %22 = arith.addf %19, %21 : vector<16x1024xf32>
      %cst_16 = arith.constant 0.000000e+00 : f32
      %23 = vector.broadcast %cst_16 : f32 to vector<16x1024xf32>
      %24 = arith.maximumf %22, %23 : vector<16x1024xf32>
      %25 = arith.truncf %24 : vector<16x1024xf32> to vector<16x1024xbf16>
      %26 = vector.extract_strided_slice %25 {offsets = [0, 0], sizes = [16, 512], strides = [1, 1]} : vector<16x1024xbf16> to vector<16x512xbf16>
      %c0_17 = arith.constant 0 : index
      %c0_18 = arith.constant 0 : index
      %c0_19 = arith.constant 0 : index
      %27 = vector.load %arg9[%c0_17, %c0_18, %c0_19] : memref<2x16x512xbf16, #tpu.memory_space<vmem>>, vector<1x16x512xbf16>
      %28 = vector.shape_cast %27 : vector<1x16x512xbf16> to vector<16x512xbf16>
      %29 = vector.shape_cast %26 : vector<16x512xbf16> to vector<1x16x512xbf16>
      tpu.vector_store %arg9[%c0_17, %c0_18, %c0_19], %29 {strides = array<i32>} : memref<2x16x512xbf16, #tpu.memory_space<vmem>>, vector<1x16x512xbf16>,
      %30 = vector.extract_strided_slice %25 {offsets = [0, 512], sizes = [16, 512], strides = [1, 1]} : vector<16x1024xbf16> to vector<16x512xbf16>
      %c1 = arith.constant 1 : index
      %c0_20 = arith.constant 0 : index
      %c0_21 = arith.constant 0 : index
      %31 = vector.load %arg9[%c1, %c0_20, %c0_21] : memref<2x16x512xbf16, #tpu.memory_space<vmem>>, vector<1x16x512xbf16>
      %32 = vector.shape_cast %31 : vector<1x16x512xbf16> to vector<16x512xbf16>
      %33 = vector.shape_cast %30 : vector<16x512xbf16> to vector<1x16x512xbf16>
      tpu.vector_store %arg9[%c1, %c0_20, %c0_21], %33 {strides = array<i32>} : memref<2x16x512xbf16, #tpu.memory_space<vmem>>, vector<1x16x512xbf16>,
    } else {
    }
    %3 = arith.index_cast %arg0 : i32 to index
    %c0 = arith.constant 0 : index
    %c0_1 = arith.constant 0 : index
    %4 = vector.load %arg9[%3, %c0, %c0_1] : memref<2x16x512xbf16, #tpu.memory_space<vmem>>, vector<1x16x512xbf16>
    %5 = vector.shape_cast %4 : vector<1x16x512xbf16> to vector<16x512xbf16>
    %c0_2 = arith.constant 0 : index
    %c0_3 = arith.constant 0 : index
    %6 = vector.load %arg4[%c0_2, %c0_3] : memref<512x1024xbf16, #tpu.memory_space<vmem>>, vector<512x1024xbf16>
    %cst = arith.constant dense<0.000000e+00> : vector<16x1024xf32>
    %7 = tpu.matmul %5, %6, %cst {dimension_numbers = #tpu.dot_dimension_numbers<[1], [0], [0], [1], [0, 0, 1, 1], [], []>} : vector<16x512xbf16>, vector<512x1024xbf16>, vector<16x1024xf32> -> vector<16x1024xf32>
    %c0_i32_4 = arith.constant 0 : i32
    %8 = arith.cmpi eq, %arg0, %c0_i32_4 : i32
    %9 = arith.extui %8 : i1 to i32
    %c0_i32_5 = arith.constant 0 : i32
    %10 = arith.cmpi ne, %9, %c0_i32_5 : i32
    scf.if %10 {
      %c0_9 = arith.constant 0 : index
      %c0_10 = arith.constant 0 : index
      %17 = vector.load %arg10[%c0_9, %c0_10] : memref<16x1024xf32, #tpu.memory_space<vmem>>, vector<16x1024xf32>
      tpu.vector_store %arg10[%c0_9, %c0_10], %7 {strides = array<i32>} : memref<16x1024xf32, #tpu.memory_space<vmem>>, vector<16x1024xf32>,
    } else {
    }
    %c0_i32_6 = arith.constant 0 : i32
    %11 = arith.cmpi ne, %arg0, %c0_i32_6 : i32
    %12 = arith.extui %11 : i1 to i32
    %c0_i32_7 = arith.constant 0 : i32
    %13 = arith.cmpi ne, %12, %c0_i32_7 : i32
    scf.if %13 {
      %c0_9 = arith.constant 0 : index
      %c0_10 = arith.constant 0 : index
      %17 = vector.load %arg10[%c0_9, %c0_10] : memref<16x1024xf32, #tpu.memory_space<vmem>>, vector<16x1024xf32>
      %18 = arith.addf %17, %7 : vector<16x1024xf32>
      %c0_11 = arith.constant 0 : index
      %c0_12 = arith.constant 0 : index
      %19 = vector.load %arg10[%c0_11, %c0_12] : memref<16x1024xf32, #tpu.memory_space<vmem>>, vector<16x1024xf32>
      tpu.vector_store %arg10[%c0_11, %c0_12], %18 {strides = array<i32>} : memref<16x1024xf32, #tpu.memory_space<vmem>>, vector<16x1024xf32>,
    } else {
    }
    %c1_i32 = arith.constant 1 : i32
    %14 = arith.cmpi eq, %arg0, %c1_i32 : i32
    %15 = arith.extui %14 : i1 to i32
    %c0_i32_8 = arith.constant 0 : i32
    %16 = arith.cmpi ne, %15, %c0_i32_8 : i32
    scf.if %16 {
      %c0_9 = arith.constant 0 : index
      %c0_10 = arith.constant 0 : index
      %17 = vector.load %arg10[%c0_9, %c0_10] : memref<16x1024xf32, #tpu.memory_space<vmem>>, vector<16x1024xf32>
      %c0_11 = arith.constant 0 : index
      %c0_12 = arith.constant 0 : index
      %18 = vector.load %arg5[%c0_11, %c0_12] : memref<1x1024xf32, #tpu.memory_space<vmem>>, vector<1x1024xf32>
      %19 = vector.broadcast %18 : vector<1x1024xf32> to vector<16x1024xf32>
      %20 = arith.addf %17, %19 : vector<16x1024xf32>
      %cst_13 = arith.constant 0.000000e+00 : f32
      %21 = vector.broadcast %cst_13 : f32 to vector<16x1024xf32>
      %22 = arith.maximumf %20, %21 : vector<16x1024xf32>
      %c0_14 = arith.constant 0 : index
      %c0_15 = arith.constant 0 : index
      %23 = vector.load %arg6[%c0_14, %c0_15] : memref<1x1024xf32, #tpu.memory_space<vmem>>, vector<1x1024xf32>
      %24 = vector.broadcast %23 : vector<1x1024xf32> to vector<16x1024xf32>
      %25 = arith.mulf %22, %24 : vector<16x1024xf32>
      %cst_16 = arith.constant dense<0.000000e+00> : vector<16xf32>
      %26 = vector.multi_reduction <add>, %25, %cst_16 [1] : vector<16x1024xf32> to vector<16xf32>
      %27 = vector.shape_cast %26 : vector<16xf32> to vector<16x1xf32>
      %c0_17 = arith.constant 0 : index
      %c0_18 = arith.constant 0 : index
      %28 = memref.load %arg7[%c0_17, %c0_18] : memref<1x1xf32, #tpu.memory_space<smem>>
      %29 = vector.broadcast %28 : f32 to vector<16x1xf32>
      %30 = arith.addf %27, %29 : vector<16x1xf32>
      %31 = vector.extract_strided_slice %30 {offsets = [0, 0], sizes = [8, 1], strides = [1, 1]} : vector<16x1xf32> to vector<8x1xf32>
      %32 = vector.extract_strided_slice %30 {offsets = [8, 0], sizes = [8, 1], strides = [1, 1]} : vector<16x1xf32> to vector<8x1xf32>
      %cst_19 = arith.constant 0.000000e+00 : f32
      %33 = vector.broadcast %cst_19 : f32 to vector<8x1xf32>
      %34 = arith.subf %33, %31 : vector<8x1xf32>
      %cst_20 = arith.constant 0.000000e+00 : f32
      %35 = vector.broadcast %cst_20 : f32 to vector<8x1xf32>
      %36 = arith.maximumf %34, %35 : vector<8x1xf32>
      %37 = math.absf %34 : vector<8x1xf32>
      %cst_21 = arith.constant 0.000000e+00 : f32
      %38 = vector.broadcast %cst_21 : f32 to vector<8x1xf32>
      %39 = arith.subf %38, %37 : vector<8x1xf32>
      %40 = math.exp %39 : vector<8x1xf32>
      %cst_22 = arith.constant 1.000000e+00 : f32
      %41 = vector.broadcast %cst_22 : f32 to vector<8x1xf32>
      %42 = arith.addf %41, %40 : vector<8x1xf32>
      %43 = math.log %42 : vector<8x1xf32>
      %44 = arith.addf %36, %43 : vector<8x1xf32>
      %45 = vector.shape_cast %44 : vector<8x1xf32> to vector<1x8x1xf32>
      %cst_23 = arith.constant dense<0.000000e+00> : vector<1xf32>
      %46 = vector.multi_reduction <add>, %45, %cst_23 [1, 2] : vector<1x8x1xf32> to vector<1xf32>
      %47 = vector.shape_cast %46 : vector<1xf32> to vector<1x1x1xf32>
      %48 = vector.extract %47[0, 0, 0] : f32 from vector<1x1x1xf32>
      %cst_24 = arith.constant 8.000000e+00 : f32
      %49 = arith.divf %48, %cst_24 : f32
      %cst_25 = arith.constant 0.000000e+00 : f32
      %50 = arith.subf %cst_25, %49 : f32
      %cst_26 = arith.constant 0.000000e+00 : f32
      %51 = vector.broadcast %cst_26 : f32 to vector<8x1xf32>
      %52 = arith.maximumf %32, %51 : vector<8x1xf32>
      %53 = math.absf %32 : vector<8x1xf32>
      %cst_27 = arith.constant 0.000000e+00 : f32
      %54 = vector.broadcast %cst_27 : f32 to vector<8x1xf32>
      %55 = arith.subf %54, %53 : vector<8x1xf32>
      %56 = math.exp %55 : vector<8x1xf32>
      %cst_28 = arith.constant 1.000000e+00 : f32
      %57 = vector.broadcast %cst_28 : f32 to vector<8x1xf32>
      %58 = arith.addf %57, %56 : vector<8x1xf32>
      %59 = math.log %58 : vector<8x1xf32>
      %60 = arith.addf %52, %59 : vector<8x1xf32>
      %61 = vector.shape_cast %60 : vector<8x1xf32> to vector<1x8x1xf32>
      %cst_29 = arith.constant dense<0.000000e+00> : vector<1xf32>
      %62 = vector.multi_reduction <add>, %61, %cst_29 [1, 2] : vector<1x8x1xf32> to vector<1xf32>
      %63 = vector.shape_cast %62 : vector<1xf32> to vector<1x1x1xf32>
      %64 = vector.extract %63[0, 0, 0] : f32 from vector<1x1x1xf32>
      %cst_30 = arith.constant 8.000000e+00 : f32
      %65 = arith.divf %64, %cst_30 : f32
      %66 = arith.subf %50, %65 : f32
      %c0_31 = arith.constant 0 : index
      %c0_32 = arith.constant 0 : index
      %67 = memref.load %arg8[%c0_31, %c0_32] : memref<1x2xf32, #tpu.memory_space<smem>>
      memref.store %66, %arg8[%c0_31, %c0_32] : memref<1x2xf32, #tpu.memory_space<smem>>
      %68 = vector.shape_cast %31 : vector<8x1xf32> to vector<1x8x1xf32>
      %cst_33 = arith.constant dense<0.000000e+00> : vector<1xf32>
      %69 = vector.multi_reduction <add>, %68, %cst_33 [1, 2] : vector<1x8x1xf32> to vector<1xf32>
      %70 = vector.shape_cast %69 : vector<1xf32> to vector<1x1x1xf32>
      %71 = vector.extract %70[0, 0, 0] : f32 from vector<1x1x1xf32>
      %cst_34 = arith.constant 8.000000e+00 : f32
      %72 = arith.divf %71, %cst_34 : f32
      %73 = math.exp %32 : vector<8x1xf32>
      %74 = vector.shape_cast %73 : vector<8x1xf32> to vector<1x8x1xf32>
      %cst_35 = arith.constant dense<0.000000e+00> : vector<1xf32>
      %75 = vector.multi_reduction <add>, %74, %cst_35 [1, 2] : vector<1x8x1xf32> to vector<1xf32>
      %76 = vector.shape_cast %75 : vector<1xf32> to vector<1x1x1xf32>
      %77 = vector.extract %76[0, 0, 0] : f32 from vector<1x1x1xf32>
      %cst_36 = arith.constant 8.000000e+00 : f32
      %78 = arith.divf %77, %cst_36 : f32
      %79 = arith.subf %72, %78 : f32
      %cst_37 = arith.constant 1.000000e+00 : f32
      %80 = arith.addf %79, %cst_37 : f32
      %c0_38 = arith.constant 0 : index
      %c1 = arith.constant 1 : index
      %81 = memref.load %arg8[%c0_38, %c1] : memref<1x2xf32, #tpu.memory_space<smem>>
      memref.store %80, %arg8[%c0_38, %c1] : memref<1x2xf32, #tpu.memory_space<smem>>
    } else {
    }
    return
  }
  func.func @transform_0(%arg0: i32) -> (i32, i32) {
    %c0_i32 = arith.constant 0 : i32
    %c0_i32_0 = arith.constant 0 : i32
    %c0_i32_1 = arith.constant 0 : i32
    return %c0_i32, %c0_i32_0 : i32, i32
  }
  func.func @transform_1(%arg0: i32) -> (i32, i32) {
    %c0_i32 = arith.constant 0 : i32
    %c0_i32_0 = arith.constant 0 : i32
    %c0_i32_1 = arith.constant 0 : i32
    return %c0_i32, %c0_i32_0 : i32, i32
  }
  func.func @transform_2(%arg0: i32) -> (i32, i32) {
    %c0_i32 = arith.constant 0 : i32
    %c0_i32_0 = arith.constant 0 : i32
    %c0_i32_1 = arith.constant 0 : i32
    return %c0_i32, %c0_i32_0 : i32, i32
  }
  func.func @transform_3(%arg0: i32) -> (i32, i32) {
    %c0_i32 = arith.constant 0 : i32
    %c0_i32_0 = arith.constant 0 : i32
    return %arg0, %c0_i32 : i32, i32
  }
  func.func @transform_4(%arg0: i32) -> (i32, i32) {
    %c0_i32 = arith.constant 0 : i32
    %c0_i32_0 = arith.constant 0 : i32
    %c0_i32_1 = arith.constant 0 : i32
    return %c0_i32, %c0_i32_0 : i32, i32
  }
  func.func @transform_5(%arg0: i32) -> (i32, i32) {
    %c0_i32 = arith.constant 0 : i32
    %c0_i32_0 = arith.constant 0 : i32
    %c0_i32_1 = arith.constant 0 : i32
    return %c0_i32, %c0_i32_0 : i32, i32
  }
  func.func @transform_6(%arg0: i32) -> (i32, i32) {
    %c0_i32 = arith.constant 0 : i32
    %c0_i32_0 = arith.constant 0 : i32
    %c0_i32_1 = arith.constant 0 : i32
    return %c0_i32, %c0_i32_0 : i32, i32
  }
  func.func @transform_7(%arg0: i32) -> (i32, i32) {
    %c0_i32 = arith.constant 0 : i32
    %c0_i32_0 = arith.constant 0 : i32
    %c0_i32_1 = arith.constant 0 : i32
    return %c0_i32, %c0_i32_0 : i32, i32
  }
}

</mosaic_0001>

<llo_original>
// kernel: mi_estimator_forward.1
$region0: #{mi_estimator_forward.1}
  #allocation0 [shape = 'u32[]', space=smem, size = 0x4, offset = 0x4, fixed_abs, tag = 'smem constant byte address 0x4 - core index']
  #allocation1 [shape = 'u32[144,128]{1,0:T(1,128)}', space=vmem, size = 0x12000, scoped, tag = 'internal scratch']
  #allocation2 [shape = 'bf16[2,16,512]{2,1,0:T(8,128)(2,1)}', space=vmem, size = 0x8000, scoped, tag = 'scratch operand']
  #allocation3 [shape = 'f32[16,1024]{1,0:T(8,128)}', space=vmem, size = 0x10000, scoped, tag = 'scratch operand']
  #allocation4 [shape = 'f32[1,1]{1,0:T(1,128)S(6)}', space=smem, size = 0x200, scoped, tag = 'scoped memory for mi_estimator_forward.1']
  %s0 = inlined_call_operand.vmem [shape: bf16[16,64], index: 0, kind: input, shape index: {}]
  %s1 = inlined_call_operand.hbm [shape: bf16[64,1024], index: 1, kind: input, shape index: {}]
  %s2 = inlined_call_operand.hbm [shape: f32[1,1024], index: 2, kind: input, shape index: {}]
  %s3 = inlined_call_operand.hbm [shape: bf16[1024,1024], index: 3, kind: input, shape index: {}]
  %s4 = inlined_call_operand.hbm [shape: f32[1,1024], index: 4, kind: input, shape index: {}]
  %s5 = inlined_call_operand.hbm [shape: f32[1,1024], index: 5, kind: input, shape index: {}]
  %s6 = inlined_call_operand.<no memory space> [shape: f32[1,1], index: 6, kind: input, shape index: {}]
  %s7 = inlined_call_operand.vmem [shape: f32[1,2], index: 7, kind: output, shape index: {}]
  %s8 = sld [smem:[#allocation0]]
  $region97: #{mi_estimator_forward.1} parent=0
    _
  %s10 = ssub.s32 1, %s8
  %s11 = scalar_select 0, %s10, %s8
  %12 = sst [smem:[#allocation4]] %s6
  $region1: #{mi_estimator_forward.1} parent=0
    #allocation5 [shape = 'u8[131072]{0}', space=vmem, size = 0x20000, scoped, tag = 'input window, operand 1, single buffered']
    #allocation6 [shape = 's32[2]{0}', space=sflag, size = 0x8, scoped, tag = 'scoped memory for mi_estimator_forward.1']
    #allocation7 [shape = 's32[2]{0}', space=sflag, size = 0x8, scoped, tag = 'scoped memory for mi_estimator_forward.1']
    #allocation8 [shape = 'u8[4096]{0}', space=vmem, size = 0x1000, scoped, tag = 'input window, operand 2, single buffered']
    #allocation9 [shape = 's32[1]{0}', space=sflag, size = 0x4, scoped, tag = 'scoped memory for mi_estimator_forward.1']
    #allocation10 [shape = 'u8[2097152]{0}', space=vmem, size = 0x200000, scoped, tag = 'input window, operand 3']
    #allocation11 [shape = 'u8[4096]{0}', space=vmem, size = 0x1000, scoped, tag = 'input window, operand 4, single buffered']
    #allocation12 [shape = 'u8[4096]{0}', space=vmem, size = 0x1000, scoped, tag = 'input window, operand 5, single buffered']
    #allocation13 [shape = 's32[1]{0}', space=sflag, size = 0x4, scoped, tag = 'scoped memory for mi_estimator_forward.1']
    #allocation14 [shape = 'u8[512]{0}', space=smem, size = 0x200, scoped, tag = 'output window, operand 0, single buffered']
    %13 = vsyncpa [#allocation6], 0
    %14 = vsyncpa [#allocation9], 0
    %15 = vsyncpa [#allocation13], 0
    %16 = vsyncpa [#allocation7], 0
    loop: start=0, step=1, limit=4
    $region2: #{mi_estimator_forward.1} parent=1 // loop_pre_header
      _
    $region3: #{mi_estimator_forward.1} parent=1 // loop_header
      %s18 = sphi 0, %s22
      %p19 = scmp.ge.s32.totalorder %s18, 4
      %s26 = sphi 0, %s26
      %s28 = sphi 0, %s26
      %s29 = sphi 0, %s28
      %s43 = sphi 0, %s29
      %s47 = sphi 0, %s47
      %s49 = sphi 0, %s47
      %s50 = sphi 0, %s49
      %s64 = sphi 0, %s50
      %s68 = sphi 0, %s68
      %s70 = sphi 0, %s68
      %s71 = sphi 0, %s70
      %s85 = sphi 0, %s71
      %s91 = sphi 0, %s93
      %s94 = sphi 0, %s91
      %s95 = sphi 0, %s94
      %s111 = sphi 0, %s95
      %s115 = sphi 0, %s115
      %s117 = sphi 0, %s115
      %s118 = sphi 0, %s117
      %s132 = sphi 0, %s118
      %s136 = sphi 0, %s136
      %s138 = sphi 0, %s136
      %s139 = sphi 0, %s138
      %s153 = sphi 0, %s139
      %s157 = sphi 0, %s157
      %s159 = sphi 0, %s157
      %s160 = sphi 0, %s159
      %s174 = sphi 0, %s160
      %s178 = sphi 0, %s178
      %s180 = sphi 0, %s178
      %s181 = sphi 0, %s180
      %s195 = sphi 0, %s181
    $region4: #{mi_estimator_forward.1} parent=1 // loop_header_branch
      %21 = sbr.rel (%p19) target = $region8
    $region5: #{mi_estimator_forward.1} parent=1 // loop_body
      %s23 = ssub.s32 %s18, 1
      %s24 = ssub.s32 %s18, 2
      %s25 = sadd.s32 %s18, 1
      %s27 = sadd.s32 %s26, 1
      %p30 = scmp.eq.s32.totalorder %s18, 1
      %p31 = scmp.ne.s32.totalorder %s26, %s28
      %p32 = scmp.eq.s32.totalorder %s18, 0
      %p33 = por %p31, %p32
      %p34 = scmp.ne.s32.totalorder %s26, %s28
      %p35 = scmp.eq.s32.totalorder %s23, 1
      %p36 = por %p34, %p35
      %p37 = scmp.ne.s32.totalorder %s28, %s29
      %p38 = scmp.eq.s32.totalorder %s23, 0
      %p39 = por %p37, %p38
      %p40 = scmp.ne.s32.totalorder %s28, %s29
      %p41 = scmp.eq.s32.totalorder %s24, 1
      %p42 = por %p40, %p41
      %p44 = scmp.ne.s32.totalorder %s29, %s43
      %p45 = scmp.eq.s32.totalorder %s24, 0
      %p46 = por %p44, %p45
      %s48 = sadd.s32 %s47, 1
      %p51 = scmp.eq.s32.totalorder %s18, 1
      %p52 = scmp.ne.s32.totalorder %s47, %s49
      %p53 = scmp.eq.s32.totalorder %s18, 0
      %p54 = por %p52, %p53
      %p55 = scmp.ne.s32.totalorder %s47, %s49
      %p56 = scmp.eq.s32.totalorder %s23, 1
      %p57 = por %p55, %p56
      %p58 = scmp.ne.s32.totalorder %s49, %s50
      %p59 = scmp.eq.s32.totalorder %s23, 0
      %p60 = por %p58, %p59
      %p61 = scmp.ne.s32.totalorder %s49, %s50
      %p62 = scmp.eq.s32.totalorder %s24, 1
      %p63 = por %p61, %p62
      %p65 = scmp.ne.s32.totalorder %s50, %s64
      %p66 = scmp.eq.s32.totalorder %s24, 0
      %p67 = por %p65, %p66
      %s69 = sadd.s32 %s68, 1
      %p72 = scmp.eq.s32.totalorder %s18, 1
      %p73 = scmp.ne.s32.totalorder %s68, %s70
      %p74 = scmp.eq.s32.totalorder %s18, 0
      %p75 = por %p73, %p74
      %p76 = scmp.ne.s32.totalorder %s68, %s70
      %p77 = scmp.eq.s32.totalorder %s23, 1
      %p78 = por %p76, %p77
      %p79 = scmp.ne.s32.totalorder %s70, %s71
      %p80 = scmp.eq.s32.totalorder %s23, 0
      %p81 = por %p79, %p80
      %p82 = scmp.ne.s32.totalorder %s70, %s71
      %p83 = scmp.eq.s32.totalorder %s24, 1
      %p84 = por %p82, %p83
      %p86 = scmp.ne.s32.totalorder %s71, %s85
      %p87 = scmp.eq.s32.totalorder %s24, 0
      %p88 = por %p86, %p87
      %s89 = ssub.s32 %s18, %s25
      %p90 = scmp.eq.s32.totalorder %s89, 0
      %s92 = sadd.s32 %s91, 1
      %s93 = scalar_select %p90, %s91, %s92
      %p96 = pneg %p90
      %p97 = scmp.eq.s32.totalorder %s18, 1
      %p98 = por %p96, %p97
      %p99 = scmp.ne.s32.totalorder %s91, %s94
      %p100 = scmp.eq.s32.totalorder %s18, 0
      %p101 = por %p99, %p100
      %p102 = scmp.ne.s32.totalorder %s91, %s94
      %p103 = scmp.eq.s32.totalorder %s23, 1
      %p104 = por %p102, %p103
      %p105 = scmp.ne.s32.totalorder %s94, %s95
      %p106 = scmp.eq.s32.totalorder %s23, 0
      %p107 = por %p105, %p106
      %p108 = scmp.ne.s32.totalorder %s94, %s95
      %p109 = scmp.eq.s32.totalorder %s24, 1
      %p110 = por %p108, %p109
      %p112 = scmp.ne.s32.totalorder %s95, %s111
      %p113 = scmp.eq.s32.totalorder %s24, 0
      %p114 = por %p112, %p113
      %s116 = sadd.s32 %s115, 1
      %p119 = scmp.eq.s32.totalorder %s18, 1
      %p120 = scmp.ne.s32.totalorder %s115, %s117
      %p121 = scmp.eq.s32.totalorder %s18, 0
      %p122 = por %p120, %p121
      %p123 = scmp.ne.s32.totalorder %s115, %s117
      %p124 = scmp.eq.s32.totalorder %s23, 1
      %p125 = por %p123, %p124
      %p126 = scmp.ne.s32.totalorder %s117, %s118
      %p127 = scmp.eq.s32.totalorder %s23, 0
      %p128 = por %p126, %p127
      %p129 = scmp.ne.s32.totalorder %s117, %s118
      %p130 = scmp.eq.s32.totalorder %s24, 1
      %p131 = por %p129, %p130
      %p133 = scmp.ne.s32.totalorder %s118, %s132
      %p134 = scmp.eq.s32.totalorder %s24, 0
      %p135 = por %p133, %p134
      %s137 = sadd.s32 %s136, 1
      %p140 = scmp.eq.s32.totalorder %s18, 1
      %p141 = scmp.ne.s32.totalorder %s136, %s138
      %p142 = scmp.eq.s32.totalorder %s18, 0
      %p143 = por %p141, %p142
      %p144 = scmp.ne.s32.totalorder %s136, %s138
      %p145 = scmp.eq.s32.totalorder %s23, 1
      %p146 = por %p144, %p145
      %p147 = scmp.ne.s32.totalorder %s138, %s139
      %p148 = scmp.eq.s32.totalorder %s23, 0
      %p149 = por %p147, %p148
      %p150 = scmp.ne.s32.totalorder %s138, %s139
      %p151 = scmp.eq.s32.totalorder %s24, 1
      %p152 = por %p150, %p151
      %p154 = scmp.ne.s32.totalorder %s139, %s153
      %p155 = scmp.eq.s32.totalorder %s24, 0
      %p156 = por %p154, %p155
      %s158 = sadd.s32 %s157, 1
      %p161 = scmp.eq.s32.totalorder %s18, 1
      %p162 = scmp.ne.s32.totalorder %s157, %s159
      %p163 = scmp.eq.s32.totalorder %s18, 0
      %p164 = por %p162, %p163
      %p165 = scmp.ne.s32.totalorder %s157, %s159
      %p166 = scmp.eq.s32.totalorder %s23, 1
      %p167 = por %p165, %p166
      %p168 = scmp.ne.s32.totalorder %s159, %s160
      %p169 = scmp.eq.s32.totalorder %s23, 0
      %p170 = por %p168, %p169
      %p171 = scmp.ne.s32.totalorder %s159, %s160
      %p172 = scmp.eq.s32.totalorder %s24, 1
      %p173 = por %p171, %p172
      %p175 = scmp.ne.s32.totalorder %s160, %s174
      %p176 = scmp.eq.s32.totalorder %s24, 0
      %p177 = por %p175, %p176
      %s179 = sadd.s32 %s178, 1
      %p182 = scmp.eq.s32.totalorder %s18, 1
      %p183 = scmp.ne.s32.totalorder %s178, %s180
      %p184 = scmp.eq.s32.totalorder %s18, 0
      %p185 = por %p183, %p184
      %p186 = scmp.ne.s32.totalorder %s178, %s180
      %p187 = scmp.eq.s32.totalorder %s23, 1
      %p188 = por %p186, %p187
      %p189 = scmp.ne.s32.totalorder %s180, %s181
      %p190 = scmp.eq.s32.totalorder %s23, 0
      %p191 = por %p189, %p190
      %p192 = scmp.ne.s32.totalorder %s180, %s181
      %p193 = scmp.eq.s32.totalorder %s24, 1
      %p194 = por %p192, %p193
      %p196 = scmp.ne.s32.totalorder %s181, %s195
      %p197 = scmp.eq.s32.totalorder %s24, 0
      %p198 = por %p196, %p197
      %p199 = scmp.le.s32.totalorder 1, %s18
      %p200 = scmp.lt.s32.totalorder %s18, 3
      %p201 = pnand %p199, %p200
      %p202 = pneg %p201
      // Predicated region
      $region9: #{mi_estimator_forward.1} parent=5 // pred_check
        _
      $region10: #{mi_estimator_forward.1} parent=5 // pred_check_branch
        %204 = sbr.rel (%p201) target = $region12
      $region11: #{mi_estimator_forward.1} parent=5 // pred_region
        %s205 = ssub.s32 %s18, 1
        // Predicated region
        $region13: #{mi_estimator_forward.1} parent=11 // pred_check
          %p206 = pneg %p39
        $region14: #{mi_estimator_forward.1} parent=11 // pred_check_branch
          %208 = sbr.rel (%p206) target = $region16
        $region15: #{mi_estimator_forward.1} parent=11 // pred_region
          _
        $region16: #{mi_estimator_forward.1} parent=11 // pred_fallthru
          _
        // Predicated region
        $region17: #{mi_estimator_forward.1} parent=11 // pred_check
          %p209 = pneg %p60
        $region18: #{mi_estimator_forward.1} parent=11 // pred_check_branch
          %211 = sbr.rel (%p209) target = $region20
        $region19: #{mi_estimator_forward.1} parent=11 // pred_region
          %s213 = ssub.s32 4096, 4096
          %214 = vsyncadd [#allocation6], %s213
          %s215 = sshll.u32 [#allocation5], 4
          %s216 = int_to_ptr.vmem [resolvable:$true] %s215
          %221 = dma.hbm_to_vmem [thread:$0]  %s1, 4096, %s216, [#allocation6], 512, 512, 32
        $region20: #{mi_estimator_forward.1} parent=11 // pred_fallthru
          _
        // Predicated region
        $region21: #{mi_estimator_forward.1} parent=11 // pred_check
          %p222 = pneg %p81
        $region22: #{mi_estimator_forward.1} parent=11 // pred_check_branch
          %224 = sbr.rel (%p222) target = $region24
        $region23: #{mi_estimator_forward.1} parent=11 // pred_region
          %s226 = ssub.s32 128, 128
          %227 = vsyncadd [#allocation9], %s226
          %s229 = sshll.u32 [#allocation8], 4
          %s230 = int_to_ptr.vmem [resolvable:$true] %s229
          %232 = dma.hbm_to_vmem [thread:$0]  %s2, 128, %s230, [#allocation9]
        $region24: #{mi_estimator_forward.1} parent=11 // pred_fallthru
          _
        // Predicated region
        $region25: #{mi_estimator_forward.1} parent=11 // pred_check
          %p233 = pneg %p128
        $region26: #{mi_estimator_forward.1} parent=11 // pred_check_branch
          %235 = sbr.rel (%p233) target = $region28
        $region27: #{mi_estimator_forward.1} parent=11 // pred_region
          %s237 = ssub.s32 128, 128
          %238 = vsyncadd [#allocation9], %s237
          %s240 = sshll.u32 [#allocation11], 4
          %s241 = int_to_ptr.vmem [resolvable:$true] %s240
          %243 = dma.hbm_to_vmem [thread:$0]  %s4, 128, %s241, [#allocation9]
        $region28: #{mi_estimator_forward.1} parent=11 // pred_fallthru
          _
        // Predicated region
        $region29: #{mi_estimator_forward.1} parent=11 // pred_check
          %p244 = pneg %p149
        $region30: #{mi_estimator_forward.1} parent=11 // pred_check_branch
          %246 = sbr.rel (%p244) target = $region32
        $region31: #{mi_estimator_forward.1} parent=11 // pred_region
          %s248 = ssub.s32 128, 128
          %249 = vsyncadd [#allocation13], %s248
          %s251 = sshll.u32 [#allocation12], 4
          %s252 = int_to_ptr.vmem [resolvable:$true] %s251
          %254 = dma.hbm_to_vmem [thread:$0]  %s5, 128, %s252, [#allocation13]
        $region32: #{mi_estimator_forward.1} parent=11 // pred_fallthru
          _
        // Predicated region
        $region33: #{mi_estimator_forward.1} parent=11 // pred_check
          %p255 = pneg %p170
        $region34: #{mi_estimator_forward.1} parent=11 // pred_check_branch
          %257 = sbr.rel (%p255) target = $region36
        $region35: #{mi_estimator_forward.1} parent=11 // pred_region
          _
        $region36: #{mi_estimator_forward.1} parent=11 // pred_fallthru
          _
      $region12: #{mi_estimator_forward.1} parent=5 // pred_fallthru
        _
      %p258 = scmp.lt.s32.totalorder %s18, 2
      // Predicated region
      $region37: #{mi_estimator_forward.1} parent=5 // pred_check
        %p259 = pneg %p258
      $region38: #{mi_estimator_forward.1} parent=5 // pred_check_branch
        %261 = sbr.rel (%p259) target = $region40
      $region39: #{mi_estimator_forward.1} parent=5 // pred_region
        // Predicated region
        $region41: #{mi_estimator_forward.1} parent=39 // pred_check
          %p262 = pneg %p101
        $region42: #{mi_estimator_forward.1} parent=39 // pred_check_branch
          %264 = sbr.rel (%p262) target = $region44
        $region43: #{mi_estimator_forward.1} parent=39 // pred_region
          %s265 = sand.u32 %s18, 1
          %s266 = scalar_lea.sflag [#allocation6], %s265
          %s267 = sand.u32 %s91, 1
          %s268 = smul.addr %s267, 2048
          %s269 = scalar_lea.vmem [#allocation10], %s268
          %s270 = smul.u32 64, %s18
          %s272 = ssub.s32 32768, 32768
          %273 = vsyncadd %s266, %s272
          %s274 = smul.addr %s270, 8
          %s275 = smul.addr %s274, 64
          %s276 = scalar_lea.hbm %s3, %s275
          %s277 = sshll.u32 %s269, 4
          %s278 = int_to_ptr.vmem [resolvable:$true] %s277
          %283 = dma.hbm_to_vmem [thread:$0]  %s276, 32768, %s278, %s266, 512, 512, 32
        $region44: #{mi_estimator_forward.1} parent=39 // pred_fallthru
          _
      $region40: #{mi_estimator_forward.1} parent=5 // pred_fallthru
        _
      %p284 = scmp.le.s32.totalorder 1, %s18
      %p285 = scmp.lt.s32.totalorder %s18, 3
      %p286 = pnand %p284, %p285
      %p287 = pneg %p286
      // Predicated region
      $region45: #{mi_estimator_forward.1} parent=5 // pred_check
        _
      $region46: #{mi_estimator_forward.1} parent=5 // pred_check_branch
        %289 = sbr.rel (%p286) target = $region48
      $region47: #{mi_estimator_forward.1} parent=5 // pred_region
        %s290 = ssub.s32 %s18, 1
        // Predicated region
        $region49: #{mi_estimator_forward.1} parent=47 // pred_check
          %p291 = pneg %p60
        $region50: #{mi_estimator_forward.1} parent=47 // pred_check_branch
          %293 = sbr.rel (%p291) target = $region52
        $region51: #{mi_estimator_forward.1} parent=47 // pred_region
          %294 = dma.done [#allocation6], 4096
        $region52: #{mi_estimator_forward.1} parent=47 // pred_fallthru
          _
        // Predicated region
        $region53: #{mi_estimator_forward.1} parent=47 // pred_check
          %p295 = pneg %p81
        $region54: #{mi_estimator_forward.1} parent=47 // pred_check_branch
          %297 = sbr.rel (%p295) target = $region56
        $region55: #{mi_estimator_forward.1} parent=47 // pred_region
          %298 = dma.done [#allocation9], 128
        $region56: #{mi_estimator_forward.1} parent=47 // pred_fallthru
          _
        %s299 = sand.u32 %s23, 1
        %s300 = scalar_lea.sflag [#allocation6], %s299
        %s301 = sand.u32 %s94, 1
        %s302 = smul.addr %s301, 2048
        %s303 = scalar_lea.vmem [#allocation10], %s302
        // Predicated region
        $region57: #{mi_estimator_forward.1} parent=47 // pred_check
          %p304 = pneg %p107
        $region58: #{mi_estimator_forward.1} parent=47 // pred_check_branch
          %306 = sbr.rel (%p304) target = $region60
        $region59: #{mi_estimator_forward.1} parent=47 // pred_region
          %307 = dma.done %s300, 32768
        $region60: #{mi_estimator_forward.1} parent=47 // pred_fallthru
          _
        // Predicated region
        $region61: #{mi_estimator_forward.1} parent=47 // pred_check
          %p308 = pneg %p128
        $region62: #{mi_estimator_forward.1} parent=47 // pred_check_branch
          %310 = sbr.rel (%p308) target = $region64
        $region63: #{mi_estimator_forward.1} parent=47 // pred_region
          %311 = dma.done [#allocation9], 128
        $region64: #{mi_estimator_forward.1} parent=47 // pred_fallthru
          _
        // Predicated region
        $region65: #{mi_estimator_forward.1} parent=47 // pred_check
          %p312 = pneg %p149
        $region66: #{mi_estimator_forward.1} parent=47 // pred_check_branch
          %314 = sbr.rel (%p312) target = $region68
        $region67: #{mi_estimator_forward.1} parent=47 // pred_region
          %315 = dma.done [#allocation13], 128
        $region68: #{mi_estimator_forward.1} parent=47 // pred_fallthru
          _
        %p316 = pneg %p39
        %p317 = pneg %p36
        %p318 = pneg %p60
        %p319 = pneg %p57
        %p320 = pneg %p81
        %p321 = pneg %p78
        %s322 = sand.u32 %s23, 1
        %s323 = scalar_lea.sflag [#allocation6], %s322
        %s324 = sand.u32 %s94, 1
        %s325 = smul.addr %s324, 2048
        %s326 = scalar_lea.vmem [#allocation10], %s325
        %p327 = pneg %p107
        %p328 = pneg %p104
        %p329 = pneg %p128
        %p330 = pneg %p125
        %p331 = pneg %p149
        %p332 = pneg %p146
        %p333 = pneg %p170
        %p334 = pneg %p167
        %p335 = pneg %p191
        %p336 = pneg %p188
        %s337 = smul.u32 64, %s23
        %p339 = scmp.eq.s32.totalorder %s23, 0
        // Predicated region
        $region69: #{mi_estimator_forward.1} parent=47 // pred_check
          %p340 = pneg %p339
        $region70: #{mi_estimator_forward.1} parent=47 // pred_check_branch
          %342 = sbr.rel (%p340) target = $region72
        $region71: #{mi_estimator_forward.1} parent=47 // pred_region
          %v343 = vld [vmem:[%s0] sm:$0xf]
          %v344 = vld [vmem:[%s0 + $0x4] sm:$0xf]
          %v345 = vld [vmem:[#allocation5] sm:$0xff]
          %v346 = vld [vmem:[#allocation5 + $0x8] sm:$0xff]
          %v347 = vld [vmem:[#allocation5 + $0x10] sm:$0xff]
          %v348 = vld [vmem:[#allocation5 + $0x18] sm:$0xff]
          %v349 = vld [vmem:[#allocation5 + $0x20] sm:$0xff]
          %v350 = vld [vmem:[#allocation5 + $0x28] sm:$0xff]
          %v351 = vld [vmem:[#allocation5 + $0x30] sm:$0xff]
          %v352 = vld [vmem:[#allocation5 + $0x38] sm:$0xff]
          %v353 = vld [vmem:[#allocation5 + $0x40] sm:$0xff]
          %v354 = vld [vmem:[#allocation5 + $0x48] sm:$0xff]
          %v355 = vld [vmem:[#allocation5 + $0x50] sm:$0xff]
          %v356 = vld [vmem:[#allocation5 + $0x58] sm:$0xff]
          %v357 = vld [vmem:[#allocation5 + $0x60] sm:$0xff]
          %v358 = vld [vmem:[#allocation5 + $0x68] sm:$0xff]
          %v359 = vld [vmem:[#allocation5 + $0x70] sm:$0xff]
          %v360 = vld [vmem:[#allocation5 + $0x78] sm:$0xff]
          %v361 = vld [vmem:[#allocation5 + $0x80] sm:$0xff]
          %v362 = vld [vmem:[#allocation5 + $0x88] sm:$0xff]
          %v363 = vld [vmem:[#allocation5 + $0x90] sm:$0xff]
          %v364 = vld [vmem:[#allocation5 + $0x98] sm:$0xff]
          %v365 = vld [vmem:[#allocation5 + $0xa0] sm:$0xff]
          %v366 = vld [vmem:[#allocation5 + $0xa8] sm:$0xff]
          %v367 = vld [vmem:[#allocation5 + $0xb0] sm:$0xff]
          %v368 = vld [vmem:[#allocation5 + $0xb8] sm:$0xff]
          %v369 = vld [vmem:[#allocation5 + $0xc0] sm:$0xff]
          %v370 = vld [vmem:[#allocation5 + $0xc8] sm:$0xff]
          %v371 = vld [vmem:[#allocation5 + $0xd0] sm:$0xff]
          %v372 = vld [vmem:[#allocation5 + $0xd8] sm:$0xff]
          %v373 = vld [vmem:[#allocation5 + $0xe0] sm:$0xff]
          %v374 = vld [vmem:[#allocation5 + $0xe8] sm:$0xff]
          %v375 = vld [vmem:[#allocation5 + $0xf0] sm:$0xff]
          %v376 = vld [vmem:[#allocation5 + $0xf8] sm:$0xff]
          %v377 = vld [vmem:[#allocation8] sm:$0xff]
          %v379 = vlaneseq
          %v380 = vshrl.u32 %v379, 7
          %v381 = vsub.s32 0, %v380
          %v382 = vrot.slane %v377, %v381
          %v383 = vlaneseq
          %v384 = vshrl.u32 %v383, 7
          %v385 = vsub.s32 1, %v384
          %v386 = vrot.slane %v377, %v385
          %v387 = vlaneseq
          %v388 = vshrl.u32 %v387, 7
          %v389 = vsub.s32 2, %v388
          %v390 = vrot.slane %v377, %v389
          %v391 = vlaneseq
          %v392 = vshrl.u32 %v391, 7
          %v393 = vsub.s32 3, %v392
          %v394 = vrot.slane %v377, %v393
          %v395 = vlaneseq
          %v396 = vshrl.u32 %v395, 7
          %v397 = vsub.s32 4, %v396
          %v398 = vrot.slane %v377, %v397
          %v399 = vlaneseq
          %v400 = vshrl.u32 %v399, 7
          %v401 = vsub.s32 5, %v400
          %v402 = vrot.slane %v377, %v401
          %v403 = vlaneseq
          %v404 = vshrl.u32 %v403, 7
          %v405 = vsub.s32 6, %v404
          %v406 = vrot.slane %v377, %v405
          %v407 = vlaneseq
          %v408 = vshrl.u32 %v407, 7
          %v409 = vsub.s32 7, %v408
          %v410 = vrot.slane %v377, %v409
          %v421 = vunpack.c.l.b16 %v343
          %v422 = vunpack.c.l.b16 %v344
          %v423 = vpack.c.b16 %v422, %v421
          %v456 = vunpack.c.l.b16 %v345
          %v457 = vunpack.c.h.b16 %v345
          %v458 = vunpack.c.l.b16 %v346
          %v459 = vunpack.c.h.b16 %v346
          %v460 = vunpack.c.l.b16 %v347
          %v461 = vunpack.c.h.b16 %v347
          %v462 = vunpack.c.l.b16 %v348
          %v463 = vunpack.c.h.b16 %v348
          %v464 = vunpack.c.l.b16 %v349
          %v465 = vunpack.c.h.b16 %v349
          %v466 = vunpack.c.l.b16 %v350
          %v467 = vunpack.c.h.b16 %v350
          %v468 = vunpack.c.l.b16 %v351
          %v469 = vunpack.c.h.b16 %v351
          %v470 = vunpack.c.l.b16 %v352
          %v471 = vunpack.c.h.b16 %v352
          %v472 = vunpack.c.l.b16 %v353
          %v473 = vunpack.c.h.b16 %v353
          %v474 = vunpack.c.l.b16 %v354
          %v475 = vunpack.c.h.b16 %v354
          %v476 = vunpack.c.l.b16 %v355
          %v477 = vunpack.c.h.b16 %v355
          %v478 = vunpack.c.l.b16 %v356
          %v479 = vunpack.c.h.b16 %v356
          %v480 = vunpack.c.l.b16 %v357
          %v481 = vunpack.c.h.b16 %v357
          %v482 = vunpack.c.l.b16 %v358
          %v483 = vunpack.c.h.b16 %v358
          %v484 = vunpack.c.l.b16 %v359
          %v485 = vunpack.c.h.b16 %v359
          %v486 = vunpack.c.l.b16 %v360
          %v487 = vunpack.c.h.b16 %v360
          %v488 = vunpack.c.l.b16 %v361
          %v489 = vunpack.c.h.b16 %v361
          %v490 = vunpack.c.l.b16 %v362
          %v491 = vunpack.c.h.b16 %v362
          %v492 = vunpack.c.l.b16 %v363
          %v493 = vunpack.c.h.b16 %v363
          %v494 = vunpack.c.l.b16 %v364
          %v495 = vunpack.c.h.b16 %v364
          %v496 = vunpack.c.l.b16 %v365
          %v497 = vunpack.c.h.b16 %v365
          %v498 = vunpack.c.l.b16 %v366
          %v499 = vunpack.c.h.b16 %v366
          %v500 = vunpack.c.l.b16 %v367
          %v501 = vunpack.c.h.b16 %v367
          %v502 = vunpack.c.l.b16 %v368
          %v503 = vunpack.c.h.b16 %v368
          %v504 = vunpack.c.l.b16 %v369
          %v505 = vunpack.c.h.b16 %v369
          %v506 = vunpack.c.l.b16 %v370
          %v507 = vunpack.c.h.b16 %v370
          %v508 = vunpack.c.l.b16 %v371
          %v509 = vunpack.c.h.b16 %v371
          %v510 = vunpack.c.l.b16 %v372
          %v511 = vunpack.c.h.b16 %v372
          %v512 = vunpack.c.l.b16 %v373
          %v513 = vunpack.c.h.b16 %v373
          %v514 = vunpack.c.l.b16 %v374
          %v515 = vunpack.c.h.b16 %v374
          %v516 = vunpack.c.l.b16 %v375
          %v517 = vunpack.c.h.b16 %v375
          %v518 = vunpack.c.l.b16 %v376
          %v519 = vunpack.c.h.b16 %v376
          %v520 = vpack.c.b16 %v464, %v456
          %v521 = vpack.c.b16 %v465, %v457
          %v522 = vpack.c.b16 %v466, %v458
          %v523 = vpack.c.b16 %v467, %v459
          %v524 = vpack.c.b16 %v468, %v460
          %v525 = vpack.c.b16 %v469, %v461
          %v526 = vpack.c.b16 %v470, %v462
          %v527 = vpack.c.b16 %v471, %v463
          %v528 = vpack.c.b16 %v480, %v472
          %v529 = vpack.c.b16 %v481, %v473
          %v530 = vpack.c.b16 %v482, %v474
          %v531 = vpack.c.b16 %v483, %v475
          %v532 = vpack.c.b16 %v484, %v476
          %v533 = vpack.c.b16 %v485, %v477
          %v534 = vpack.c.b16 %v486, %v478
          %v535 = vpack.c.b16 %v487, %v479
          %v536 = vpack.c.b16 %v496, %v488
          %v537 = vpack.c.b16 %v497, %v489
          %v538 = vpack.c.b16 %v498, %v490
          %v539 = vpack.c.b16 %v499, %v491
          %v540 = vpack.c.b16 %v500, %v492
          %v541 = vpack.c.b16 %v501, %v493
          %v542 = vpack.c.b16 %v502, %v494
          %v543 = vpack.c.b16 %v503, %v495
          %v544 = vpack.c.b16 %v512, %v504
          %v545 = vpack.c.b16 %v513, %v505
          %v546 = vpack.c.b16 %v514, %v506
          %v547 = vpack.c.b16 %v515, %v507
          %v548 = vpack.c.b16 %v516, %v508
          %v549 = vpack.c.b16 %v517, %v509
          %v550 = vpack.c.b16 %v518, %v510
          %v551 = vpack.c.b16 %v519, %v511
          %vm584 = vcmask 523264
          %v586 = vsel %vm584, %v423, 0
          %588 = vmatprep.subr.bf16.mxu0 0
          %589 = vmatpush1.bf16.msra.mxu0 0
          %590 = vmatprep.subr.bf16.mxu0 0
          %591 = vmatpush1.bf16.msra.mxu0 0
          %592 = vmatprep.subr.bf16.mxu0 0
          %593 = vmatpush1.bf16.msra.mxu0 0
          %594 = vmatprep.subr.bf16.mxu0 0
          %595 = vmatpush1.bf16.msra.mxu0 0
          %596 = vmatprep.subr.bf16.mxu0 %v545
          %597 = vmatpush1.bf16.msra.mxu0 %v544
          %598 = vmatprep.subr.bf16.mxu0 %v537
          %599 = vmatpush1.bf16.msra.mxu0 %v536
          %600 = vmatprep.subr.bf16.mxu0 %v529
          %601 = vmatpush1.bf16.msra.mxu0 %v528
          %602 = vmatprep.subr.bf16.mxu0 %v521
          %603 = vmatpush1.bf16.msra.mxu0 %v520
          %604 = vmatprep.subr.bf16.mxu0 0
          %605 = vmatpush2.bf16.msra.mxu0 0
          %606 = vmatprep.subr.bf16.mxu0 0
          %607 = vmatpush2.bf16.msra.mxu0 0
          %608 = vmatprep.subr.bf16.mxu0 0
          %609 = vmatpush2.bf16.msra.mxu0 0
          %610 = vmatprep.subr.bf16.mxu0 0
          %611 = vmatpush2.bf16.msra.mxu0 0
          %612 = vmatprep.subr.bf16.mxu0 0
          %613 = vmatpush2.bf16.msra.mxu0 0
          %614 = vmatprep.subr.bf16.mxu0 0
          %615 = vmatpush2.bf16.msra.mxu0 0
          %616 = vmatprep.subr.bf16.mxu0 0
          %617 = vmatpush2.bf16.msra.mxu0 0
          %618 = vmatprep.subr.bf16.mxu0 0
          %619 = vmatpush2.bf16.msra.mxu0 0
          %620 = vmatprep.mubr.bf16.mxu0 0
          %621 = vmatmul.mubr.bf16.gmra.mxu0 %v586
          %v622 = vpop.f32.mrf.mxu0
          %v623 = vadd.f32 %v382, %v622
          %v624 = vpop.f32.mrf.mxu0
          %v625 = vadd.f32 %v386, %v624
          %v626 = vpop.f32.mrf.mxu0
          %v627 = vadd.f32 %v382, %v626
          %v628 = vpop.f32.mrf.mxu0
          %v629 = vadd.f32 %v386, %v628
          %630 = vdwg.mxu0
          %631 = vmatprep.subr.bf16.mxu0 0
          %632 = vmatpush1.bf16.msra.mxu0 0
          %633 = vmatprep.subr.bf16.mxu0 0
          %634 = vmatpush1.bf16.msra.mxu0 0
          %635 = vmatprep.subr.bf16.mxu0 0
          %636 = vmatpush1.bf16.msra.mxu0 0
          %637 = vmatprep.subr.bf16.mxu0 0
          %638 = vmatpush1.bf16.msra.mxu0 0
          %639 = vmatprep.subr.bf16.mxu0 %v547
          %640 = vmatpush1.bf16.msra.mxu0 %v546
          %641 = vmatprep.subr.bf16.mxu0 %v539
          %642 = vmatpush1.bf16.msra.mxu0 %v538
          %643 = vmatprep.subr.bf16.mxu0 %v531
          %644 = vmatpush1.bf16.msra.mxu0 %v530
          %645 = vmatprep.subr.bf16.mxu0 %v523
          %646 = vmatpush1.bf16.msra.mxu0 %v522
          %647 = vmatprep.subr.bf16.mxu0 0
          %648 = vmatpush2.bf16.msra.mxu0 0
          %649 = vmatprep.subr.bf16.mxu0 0
          %650 = vmatpush2.bf16.msra.mxu0 0
          %651 = vmatprep.subr.bf16.mxu0 0
          %652 = vmatpush2.bf16.msra.mxu0 0
          %653 = vmatprep.subr.bf16.mxu0 0
          %654 = vmatpush2.bf16.msra.mxu0 0
          %655 = vmatprep.subr.bf16.mxu0 0
          %656 = vmatpush2.bf16.msra.mxu0 0
          %657 = vmatprep.subr.bf16.mxu0 0
          %658 = vmatpush2.bf16.msra.mxu0 0
          %659 = vmatprep.subr.bf16.mxu0 0
          %660 = vmatpush2.bf16.msra.mxu0 0
          %661 = vmatprep.subr.bf16.mxu0 0
          %662 = vmatpush2.bf16.msra.mxu0 0
          %663 = vmatprep.mubr.bf16.mxu0 0
          %664 = vmatmul.mubr.bf16.gmra.mxu0 %v586
          %v665 = vpop.f32.mrf.mxu0
          %v666 = vadd.f32 %v390, %v665
          %v667 = vpop.f32.mrf.mxu0
          %v668 = vadd.f32 %v394, %v667
          %v669 = vpop.f32.mrf.mxu0
          %v670 = vadd.f32 %v390, %v669
          %v671 = vpop.f32.mrf.mxu0
          %v672 = vadd.f32 %v394, %v671
          %673 = vdwg.mxu0
          %674 = vmatprep.subr.bf16.mxu0 0
          %675 = vmatpush1.bf16.msra.mxu0 0
          %676 = vmatprep.subr.bf16.mxu0 0
          %677 = vmatpush1.bf16.msra.mxu0 0
          %678 = vmatprep.subr.bf16.mxu0 0
          %679 = vmatpush1.bf16.msra.mxu0 0
          %680 = vmatprep.subr.bf16.mxu0 0
          %681 = vmatpush1.bf16.msra.mxu0 0
          %682 = vmatprep.subr.bf16.mxu0 %v549
          %683 = vmatpush1.bf16.msra.mxu0 %v548
          %684 = vmatprep.subr.bf16.mxu0 %v541
          %685 = vmatpush1.bf16.msra.mxu0 %v540
          %686 = vmatprep.subr.bf16.mxu0 %v533
          %687 = vmatpush1.bf16.msra.mxu0 %v532
          %688 = vmatprep.subr.bf16.mxu0 %v525
          %689 = vmatpush1.bf16.msra.mxu0 %v524
          %690 = vmatprep.subr.bf16.mxu0 0
          %691 = vmatpush2.bf16.msra.mxu0 0
          %692 = vmatprep.subr.bf16.mxu0 0
          %693 = vmatpush2.bf16.msra.mxu0 0
          %694 = vmatprep.subr.bf16.mxu0 0
          %695 = vmatpush2.bf16.msra.mxu0 0
          %696 = vmatprep.subr.bf16.mxu0 0
          %697 = vmatpush2.bf16.msra.mxu0 0
          %698 = vmatprep.subr.bf16.mxu0 0
          %699 = vmatpush2.bf16.msra.mxu0 0
          %700 = vmatprep.subr.bf16.mxu0 0
          %701 = vmatpush2.bf16.msra.mxu0 0
          %702 = vmatprep.subr.bf16.mxu0 0
          %703 = vmatpush2.bf16.msra.mxu0 0
          %704 = vmatprep.subr.bf16.mxu0 0
          %705 = vmatpush2.bf16.msra.mxu0 0
          %706 = vmatprep.mubr.bf16.mxu0 0
          %707 = vmatmul.mubr.bf16.gmra.mxu0 %v586
          %v708 = vpop.f32.mrf.mxu0
          %v709 = vadd.f32 %v398, %v708
          %v710 = vpop.f32.mrf.mxu0
          %v711 = vadd.f32 %v402, %v710
          %v712 = vpop.f32.mrf.mxu0
          %v713 = vadd.f32 %v398, %v712
          %v714 = vpop.f32.mrf.mxu0
          %v715 = vadd.f32 %v402, %v714
          %716 = vdwg.mxu0
          %717 = vmatprep.subr.bf16.mxu0 0
          %718 = vmatpush1.bf16.msra.mxu0 0
          %719 = vmatprep.subr.bf16.mxu0 0
          %720 = vmatpush1.bf16.msra.mxu0 0
          %721 = vmatprep.subr.bf16.mxu0 0
          %722 = vmatpush1.bf16.msra.mxu0 0
          %723 = vmatprep.subr.bf16.mxu0 0
          %724 = vmatpush1.bf16.msra.mxu0 0
          %725 = vmatprep.subr.bf16.mxu0 %v551
          %726 = vmatpush1.bf16.msra.mxu0 %v550
          %727 = vmatprep.subr.bf16.mxu0 %v543
          %728 = vmatpush1.bf16.msra.mxu0 %v542
          %729 = vmatprep.subr.bf16.mxu0 %v535
          %730 = vmatpush1.bf16.msra.mxu0 %v534
          %731 = vmatprep.subr.bf16.mxu0 %v527
          %732 = vmatpush1.bf16.msra.mxu0 %v526
          %733 = vmatprep.subr.bf16.mxu0 0
          %734 = vmatpush2.bf16.msra.mxu0 0
          %735 = vmatprep.subr.bf16.mxu0 0
          %736 = vmatpush2.bf16.msra.mxu0 0
          %737 = vmatprep.subr.bf16.mxu0 0
          %738 = vmatpush2.bf16.msra.mxu0 0
          %739 = vmatprep.subr.bf16.mxu0 0
          %740 = vmatpush2.bf16.msra.mxu0 0
          %741 = vmatprep.subr.bf16.mxu0 0
          %742 = vmatpush2.bf16.msra.mxu0 0
          %743 = vmatprep.subr.bf16.mxu0 0
          %744 = vmatpush2.bf16.msra.mxu0 0
          %745 = vmatprep.subr.bf16.mxu0 0
          %746 = vmatpush2.bf16.msra.mxu0 0
          %747 = vmatprep.subr.bf16.mxu0 0
          %748 = vmatpush2.bf16.msra.mxu0 0
          %749 = vmatprep.mubr.bf16.mxu0 0
          %750 = vmatmul.mubr.bf16.gmra.mxu0 %v586
          %v751 = vpop.f32.mrf.mxu0
          %v752 = vadd.f32 %v406, %v751
          %v753 = vpop.f32.mrf.mxu0
          %v754 = vadd.f32 %v410, %v753
          %v755 = vpop.f32.mrf.mxu0
          %v756 = vadd.f32 %v406, %v755
          %v757 = vpop.f32.mrf.mxu0
          %v758 = vadd.f32 %v410, %v757
          %759 = vdwg.mxu0
          %v760 = vmax.f32 %v623, 0.0
          %v761 = vmax.f32 %v625, 0.0
          %v762 = vmax.f32 %v666, 0.0
          %v763 = vmax.f32 %v668, 0.0
          %v764 = vmax.f32 %v709, 0.0
          %v765 = vmax.f32 %v711, 0.0
          %v766 = vmax.f32 %v752, 0.0
          %v767 = vmax.f32 %v754, 0.0
          %v768 = vmax.f32 %v627, 0.0
          %v769 = vmax.f32 %v629, 0.0
          %v770 = vmax.f32 %v670, 0.0
          %v771 = vmax.f32 %v672, 0.0
          %v772 = vmax.f32 %v713, 0.0
          %v773 = vmax.f32 %v715, 0.0
          %v774 = vmax.f32 %v756, 0.0
          %v775 = vmax.f32 %v758, 0.0
          %v776 = vpack.c.bf16 %v768, %v760
          %v777 = vpack.c.bf16 %v769, %v761
          %v778 = vpack.c.bf16 %v770, %v762
          %v779 = vpack.c.bf16 %v771, %v763
          %v780 = vpack.c.bf16 %v772, %v764
          %v781 = vpack.c.bf16 %v773, %v765
          %v782 = vpack.c.bf16 %v774, %v766
          %v783 = vpack.c.bf16 %v775, %v767
          %v788 = vunpack.c.l.b16 %v776
          %v789 = vunpack.c.l.b16 %v777
          %v790 = vunpack.c.l.b16 %v778
          %v791 = vunpack.c.l.b16 %v779
          %v792 = vunpack.c.h.b16 %v776
          %v793 = vunpack.c.h.b16 %v777
          %v794 = vunpack.c.h.b16 %v778
          %v795 = vunpack.c.h.b16 %v779
          %v796 = vpack.c.b16 %v789, %v788
          %v797 = vpack.c.b16 %v791, %v790
          %v798 = vpack.c.b16 %v793, %v792
          %v799 = vpack.c.b16 %v795, %v794
          %804 = vst [vmem:[#allocation2] sm:$0xff] %v796
          %805 = vst [vmem:[#allocation2 + $0x8] sm:$0xff] %v797
          %806 = vst [vmem:[#allocation2 + $0x10] sm:$0xff] %v798
          %807 = vst [vmem:[#allocation2 + $0x18] sm:$0xff] %v799
          %v812 = vunpack.c.l.b16 %v780
          %v813 = vunpack.c.l.b16 %v781
          %v814 = vunpack.c.l.b16 %v782
          %v815 = vunpack.c.l.b16 %v783
          %v816 = vunpack.c.h.b16 %v780
          %v817 = vunpack.c.h.b16 %v781
          %v818 = vunpack.c.h.b16 %v782
          %v819 = vunpack.c.h.b16 %v783
          %v820 = vpack.c.b16 %v813, %v812
          %v821 = vpack.c.b16 %v815, %v814
          %v822 = vpack.c.b16 %v817, %v816
          %v823 = vpack.c.b16 %v819, %v818
          %s828 = scalar_lea.vmem [#allocation2], 32
          %829 = vst [vmem:[%s828] sm:$0xff] %v820
          %830 = vst [vmem:[%s828 + $0x8] sm:$0xff] %v821
          %831 = vst [vmem:[%s828 + $0x10] sm:$0xff] %v822
          %832 = vst [vmem:[%s828 + $0x18] sm:$0xff] %v823
        $region72: #{mi_estimator_forward.1} parent=47 // pred_fallthru
          _
        %s833 = smul.u32 %s23, 8
        %s834 = smul.addr %s833, 4
        %s835 = scalar_lea.vmem [#allocation2], %s834
        %v836 = vld [vmem:[%s835] sm:$0xff]
        %v837 = vld [vmem:[%s835 + $0x8] sm:$0xff]
        %v838 = vld [vmem:[%s835 + $0x10] sm:$0xff]
        %v839 = vld [vmem:[%s835 + $0x18] sm:$0xff]
        %v840 = vld [vmem:[%s303] sm:$0xff]
        %v841 = vld [vmem:[%s303 + $0x8] sm:$0xff]
        %v842 = vld [vmem:[%s303 + $0x10] sm:$0xff]
        %v843 = vld [vmem:[%s303 + $0x18] sm:$0xff]
        %v844 = vld [vmem:[%s303 + $0x20] sm:$0xff]
        %v845 = vld [vmem:[%s303 + $0x28] sm:$0xff]
        %v846 = vld [vmem:[%s303 + $0x30] sm:$0xff]
        %v847 = vld [vmem:[%s303 + $0x38] sm:$0xff]
        %v848 = vld [vmem:[%s303 + $0x40] sm:$0xff]
        %v849 = vld [vmem:[%s303 + $0x48] sm:$0xff]
        %v850 = vld [vmem:[%s303 + $0x50] sm:$0xff]
        %v851 = vld [vmem:[%s303 + $0x58] sm:$0xff]
        %v852 = vld [vmem:[%s303 + $0x60] sm:$0xff]
        %v853 = vld [vmem:[%s303 + $0x68] sm:$0xff]
        %v854 = vld [vmem:[%s303 + $0x70] sm:$0xff]
        %v855 = vld [vmem:[%s303 + $0x78] sm:$0xff]
        %v856 = vld [vmem:[%s303 + $0x80] sm:$0xff]
        %v857 = vld [vmem:[%s303 + $0x88] sm:$0xff]
        %v858 = vld [vmem:[%s303 + $0x90] sm:$0xff]
        %v859 = vld [vmem:[%s303 + $0x98] sm:$0xff]
        %v860 = vld [vmem:[%s303 + $0xa0] sm:$0xff]
        %v861 = vld [vmem:[%s303 + $0xa8] sm:$0xff]
        %v862 = vld [vmem:[%s303 + $0xb0] sm:$0xff]
        %v863 = vld [vmem:[%s303 + $0xb8] sm:$0xff]
        %v864 = vld [vmem:[%s303 + $0xc0] sm:$0xff]
        %v865 = vld [vmem:[%s303 + $0xc8] sm:$0xff]
        %v866 = vld [vmem:[%s303 + $0xd0] sm:$0xff]
        %v867 = vld [vmem:[%s303 + $0xd8] sm:$0xff]
        %v868 = vld [vmem:[%s303 + $0xe0] sm:$0xff]
        %v869 = vld [vmem:[%s303 + $0xe8] sm:$0xff]
        %v870 = vld [vmem:[%s303 + $0xf0] sm:$0xff]
        %v871 = vld [vmem:[%s303 + $0xf8] sm:$0xff]
        %v872 = vld [vmem:[%s303 + $0x100] sm:$0xff]
        %v873 = vld [vmem:[%s303 + $0x108] sm:$0xff]
        %v874 = vld [vmem:[%s303 + $0x110] sm:$0xff]
        %v875 = vld [vmem:[%s303 + $0x118] sm:$0xff]
        %v876 = vld [vmem:[%s303 + $0x120] sm:$0xff]
        %v877 = vld [vmem:[%s303 + $0x128] sm:$0xff]
        %v878 = vld [vmem:[%s303 + $0x130] sm:$0xff]
        %v879 = vld [vmem:[%s303 + $0x138] sm:$0xff]
        %v880 = vld [vmem:[%s303 + $0x140] sm:$0xff]
        %v881 = vld [vmem:[%s303 + $0x148] sm:$0xff]
        %v882 = vld [vmem:[%s303 + $0x150] sm:$0xff]
        %v883 = vld [vmem:[%s303 + $0x158] sm:$0xff]
        %v884 = vld [vmem:[%s303 + $0x160] sm:$0xff]
        %v885 = vld [vmem:[%s303 + $0x168] sm:$0xff]
        %v886 = vld [vmem:[%s303 + $0x170] sm:$0xff]
        %v887 = vld [vmem:[%s303 + $0x178] sm:$0xff]
        %v888 = vld [vmem:[%s303 + $0x180] sm:$0xff]
        %v889 = vld [vmem:[%s303 + $0x188] sm:$0xff]
        %v890 = vld [vmem:[%s303 + $0x190] sm:$0xff]
        %v891 = vld [vmem:[%s303 + $0x198] sm:$0xff]
        %v892 = vld [vmem:[%s303 + $0x1a0] sm:$0xff]
        %v893 = vld [vmem:[%s303 + $0x1a8] sm:$0xff]
        %v894 = vld [vmem:[%s303 + $0x1b0] sm:$0xff]
        %v895 = vld [vmem:[%s303 + $0x1b8] sm:$0xff]
        %v896 = vld [vmem:[%s303 + $0x1c0] sm:$0xff]
        %v897 = vld [vmem:[%s303 + $0x1c8] sm:$0xff]
        %v898 = vld [vmem:[%s303 + $0x1d0] sm:$0xff]
        %v899 = vld [vmem:[%s303 + $0x1d8] sm:$0xff]
        %v900 = vld [vmem:[%s303 + $0x1e0] sm:$0xff]
        %v901 = vld [vmem:[%s303 + $0x1e8] sm:$0xff]
        %v902 = vld [vmem:[%s303 + $0x1f0] sm:$0xff]
        %v903 = vld [vmem:[%s303 + $0x1f8] sm:$0xff]
        %v904 = vld [vmem:[%s303 + $0x200] sm:$0xff]
        %v905 = vld [vmem:[%s303 + $0x208] sm:$0xff]
        %v906 = vld [vmem:[%s303 + $0x210] sm:$0xff]
        %v907 = vld [vmem:[%s303 + $0x218] sm:$0xff]
        %v908 = vld [vmem:[%s303 + $0x220] sm:$0xff]
        %v909 = vld [vmem:[%s303 + $0x228] sm:$0xff]
        %v910 = vld [vmem:[%s303 + $0x230] sm:$0xff]
        %v911 = vld [vmem:[%s303 + $0x238] sm:$0xff]
        %v912 = vld [vmem:[%s303 + $0x240] sm:$0xff]
        %v913 = vld [vmem:[%s303 + $0x248] sm:$0xff]
        %v914 = vld [vmem:[%s303 + $0x250] sm:$0xff]
        %v915 = vld [vmem:[%s303 + $0x258] sm:$0xff]
        %v916 = vld [vmem:[%s303 + $0x260] sm:$0xff]
        %v917 = vld [vmem:[%s303 + $0x268] sm:$0xff]
        %v918 = vld [vmem:[%s303 + $0x270] sm:$0xff]
        %v919 = vld [vmem:[%s303 + $0x278] sm:$0xff]
        %v920 = vld [vmem:[%s303 + $0x280] sm:$0xff]
        %v921 = vld [vmem:[%s303 + $0x288] sm:$0xff]
        %v922 = vld [vmem:[%s303 + $0x290] sm:$0xff]
        %v923 = vld [vmem:[%s303 + $0x298] sm:$0xff]
        %v924 = vld [vmem:[%s303 + $0x2a0] sm:$0xff]
        %v925 = vld [vmem:[%s303 + $0x2a8] sm:$0xff]
        %v926 = vld [vmem:[%s303 + $0x2b0] sm:$0xff]
        %v927 = vld [vmem:[%s303 + $0x2b8] sm:$0xff]
        %v928 = vld [vmem:[%s303 + $0x2c0] sm:$0xff]
        %v929 = vld [vmem:[%s303 + $0x2c8] sm:$0xff]
        %v930 = vld [vmem:[%s303 + $0x2d0] sm:$0xff]
        %v931 = vld [vmem:[%s303 + $0x2d8] sm:$0xff]
        %v932 = vld [vmem:[%s303 + $0x2e0] sm:$0xff]
        %v933 = vld [vmem:[%s303 + $0x2e8] sm:$0xff]
        %v934 = vld [vmem:[%s303 + $0x2f0] sm:$0xff]
        %v935 = vld [vmem:[%s303 + $0x2f8] sm:$0xff]
        %v936 = vld [vmem:[%s303 + $0x300] sm:$0xff]
        %v937 = vld [vmem:[%s303 + $0x308] sm:$0xff]
        %v938 = vld [vmem:[%s303 + $0x310] sm:$0xff]
        %v939 = vld [vmem:[%s303 + $0x318] sm:$0xff]
        %v940 = vld [vmem:[%s303 + $0x320] sm:$0xff]
        %v941 = vld [vmem:[%s303 + $0x328] sm:$0xff]
        %v942 = vld [vmem:[%s303 + $0x330] sm:$0xff]
        %v943 = vld [vmem:[%s303 + $0x338] sm:$0xff]
        %v944 = vld [vmem:[%s303 + $0x340] sm:$0xff]
        %v945 = vld [vmem:[%s303 + $0x348] sm:$0xff]
        %v946 = vld [vmem:[%s303 + $0x350] sm:$0xff]
        %v947 = vld [vmem:[%s303 + $0x358] sm:$0xff]
        %v948 = vld [vmem:[%s303 + $0x360] sm:$0xff]
        %v949 = vld [vmem:[%s303 + $0x368] sm:$0xff]
        %v950 = vld [vmem:[%s303 + $0x370] sm:$0xff]
        %v951 = vld [vmem:[%s303 + $0x378] sm:$0xff]
        %v952 = vld [vmem:[%s303 + $0x380] sm:$0xff]
        %v953 = vld [vmem:[%s303 + $0x388] sm:$0xff]
        %v954 = vld [vmem:[%s303 + $0x390] sm:$0xff]
        %v955 = vld [vmem:[%s303 + $0x398] sm:$0xff]
        %v956 = vld [vmem:[%s303 + $0x3a0] sm:$0xff]
        %v957 = vld [vmem:[%s303 + $0x3a8] sm:$0xff]
        %v958 = vld [vmem:[%s303 + $0x3b0] sm:$0xff]
        %v959 = vld [vmem:[%s303 + $0x3b8] sm:$0xff]
        %v960 = vld [vmem:[%s303 + $0x3c0] sm:$0xff]
        %v961 = vld [vmem:[%s303 + $0x3c8] sm:$0xff]
        %v962 = vld [vmem:[%s303 + $0x3d0] sm:$0xff]
        %v963 = vld [vmem:[%s303 + $0x3d8] sm:$0xff]
        %v964 = vld [vmem:[%s303 + $0x3e0] sm:$0xff]
        %v965 = vld [vmem:[%s303 + $0x3e8] sm:$0xff]
        %v966 = vld [vmem:[%s303 + $0x3f0] sm:$0xff]
        %v967 = vld [vmem:[%s303 + $0x3f8] sm:$0xff]
        %v968 = vld [vmem:[%s303 + $0x400] sm:$0xff]
        %v969 = vld [vmem:[%s303 + $0x408] sm:$0xff]
        %v970 = vld [vmem:[%s303 + $0x410] sm:$0xff]
        %v971 = vld [vmem:[%s303 + $0x418] sm:$0xff]
        %v972 = vld [vmem:[%s303 + $0x420] sm:$0xff]
        %v973 = vld [vmem:[%s303 + $0x428] sm:$0xff]
        %v974 = vld [vmem:[%s303 + $0x430] sm:$0xff]
        %v975 = vld [vmem:[%s303 + $0x438] sm:$0xff]
        %v976 = vld [vmem:[%s303 + $0x440] sm:$0xff]
        %v977 = vld [vmem:[%s303 + $0x448] sm:$0xff]
        %v978 = vld [vmem:[%s303 + $0x450] sm:$0xff]
        %v979 = vld [vmem:[%s303 + $0x458] sm:$0xff]
        %v980 = vld [vmem:[%s303 + $0x460] sm:$0xff]
        %v981 = vld [vmem:[%s303 + $0x468] sm:$0xff]
        %v982 = vld [vmem:[%s303 + $0x470] sm:$0xff]
        %v983 = vld [vmem:[%s303 + $0x478] sm:$0xff]
        %v984 = vld [vmem:[%s303 + $0x480] sm:$0xff]
        %v985 = vld [vmem:[%s303 + $0x488] sm:$0xff]
        %v986 = vld [vmem:[%s303 + $0x490] sm:$0xff]
        %v987 = vld [vmem:[%s303 + $0x498] sm:$0xff]
        %v988 = vld [vmem:[%s303 + $0x4a0] sm:$0xff]
        %v989 = vld [vmem:[%s303 + $0x4a8] sm:$0xff]
        %v990 = vld [vmem:[%s303 + $0x4b0] sm:$0xff]
        %v991 = vld [vmem:[%s303 + $0x4b8] sm:$0xff]
        %v992 = vld [vmem:[%s303 + $0x4c0] sm:$0xff]
        %v993 = vld [vmem:[%s303 + $0x4c8] sm:$0xff]
        %v994 = vld [vmem:[%s303 + $0x4d0] sm:$0xff]
        %v995 = vld [vmem:[%s303 + $0x4d8] sm:$0xff]
        %v996 = vld [vmem:[%s303 + $0x4e0] sm:$0xff]
        %v997 = vld [vmem:[%s303 + $0x4e8] sm:$0xff]
        %v998 = vld [vmem:[%s303 + $0x4f0] sm:$0xff]
        %v999 = vld [vmem:[%s303 + $0x4f8] sm:$0xff]
        %v1000 = vld [vmem:[%s303 + $0x500] sm:$0xff]
        %v1001 = vld [vmem:[%s303 + $0x508] sm:$0xff]
        %v1002 = vld [vmem:[%s303 + $0x510] sm:$0xff]
        %v1003 = vld [vmem:[%s303 + $0x518] sm:$0xff]
        %v1004 = vld [vmem:[%s303 + $0x520] sm:$0xff]
        %v1005 = vld [vmem:[%s303 + $0x528] sm:$0xff]
        %v1006 = vld [vmem:[%s303 + $0x530] sm:$0xff]
        %v1007 = vld [vmem:[%s303 + $0x538] sm:$0xff]
        %v1008 = vld [vmem:[%s303 + $0x540] sm:$0xff]
        %v1009 = vld [vmem:[%s303 + $0x548] sm:$0xff]
        %v1010 = vld [vmem:[%s303 + $0x550] sm:$0xff]
        %v1011 = vld [vmem:[%s303 + $0x558] sm:$0xff]
        %v1012 = vld [vmem:[%s303 + $0x560] sm:$0xff]
        %v1013 = vld [vmem:[%s303 + $0x568] sm:$0xff]
        %v1014 = vld [vmem:[%s303 + $0x570] sm:$0xff]
        %v1015 = vld [vmem:[%s303 + $0x578] sm:$0xff]
        %v1016 = vld [vmem:[%s303 + $0x580] sm:$0xff]
        %v1017 = vld [vmem:[%s303 + $0x588] sm:$0xff]
        %v1018 = vld [vmem:[%s303 + $0x590] sm:$0xff]
        %v1019 = vld [vmem:[%s303 + $0x598] sm:$0xff]
        %v1020 = vld [vmem:[%s303 + $0x5a0] sm:$0xff]
        %v1021 = vld [vmem:[%s303 + $0x5a8] sm:$0xff]
        %v1022 = vld [vmem:[%s303 + $0x5b0] sm:$0xff]
        %v1023 = vld [vmem:[%s303 + $0x5b8] sm:$0xff]
        %v1024 = vld [vmem:[%s303 + $0x5c0] sm:$0xff]
        %v1025 = vld [vmem:[%s303 + $0x5c8] sm:$0xff]
        %v1026 = vld [vmem:[%s303 + $0x5d0] sm:$0xff]
        %v1027 = vld [vmem:[%s303 + $0x5d8] sm:$0xff]
        %v1028 = vld [vmem:[%s303 + $0x5e0] sm:$0xff]
        %v1029 = vld [vmem:[%s303 + $0x5e8] sm:$0xff]
        %v1030 = vld [vmem:[%s303 + $0x5f0] sm:$0xff]
        %v1031 = vld [vmem:[%s303 + $0x5f8] sm:$0xff]
        %v1032 = vld [vmem:[%s303 + $0x600] sm:$0xff]
        %v1033 = vld [vmem:[%s303 + $0x608] sm:$0xff]
        %v1034 = vld [vmem:[%s303 + $0x610] sm:$0xff]
        %v1035 = vld [vmem:[%s303 + $0x618] sm:$0xff]
        %v1036 = vld [vmem:[%s303 + $0x620] sm:$0xff]
        %v1037 = vld [vmem:[%s303 + $0x628] sm:$0xff]
        %v1038 = vld [vmem:[%s303 + $0x630] sm:$0xff]
        %v1039 = vld [vmem:[%s303 + $0x638] sm:$0xff]
        %v1040 = vld [vmem:[%s303 + $0x640] sm:$0xff]
        %v1041 = vld [vmem:[%s303 + $0x648] sm:$0xff]
        %v1042 = vld [vmem:[%s303 + $0x650] sm:$0xff]
        %v1043 = vld [vmem:[%s303 + $0x658] sm:$0xff]
        %v1044 = vld [vmem:[%s303 + $0x660] sm:$0xff]
        %v1045 = vld [vmem:[%s303 + $0x668] sm:$0xff]
        %v1046 = vld [vmem:[%s303 + $0x670] sm:$0xff]
        %v1047 = vld [vmem:[%s303 + $0x678] sm:$0xff]
        %v1048 = vld [vmem:[%s303 + $0x680] sm:$0xff]
        %v1049 = vld [vmem:[%s303 + $0x688] sm:$0xff]
        %v1050 = vld [vmem:[%s303 + $0x690] sm:$0xff]
        %v1051 = vld [vmem:[%s303 + $0x698] sm:$0xff]
        %v1052 = vld [vmem:[%s303 + $0x6a0] sm:$0xff]
        %v1053 = vld [vmem:[%s303 + $0x6a8] sm:$0xff]
        %v1054 = vld [vmem:[%s303 + $0x6b0] sm:$0xff]
        %v1055 = vld [vmem:[%s303 + $0x6b8] sm:$0xff]
        %v1056 = vld [vmem:[%s303 + $0x6c0] sm:$0xff]
        %v1057 = vld [vmem:[%s303 + $0x6c8] sm:$0xff]
        %v1058 = vld [vmem:[%s303 + $0x6d0] sm:$0xff]
        %v1059 = vld [vmem:[%s303 + $0x6d8] sm:$0xff]
        %v1060 = vld [vmem:[%s303 + $0x6e0] sm:$0xff]
        %v1061 = vld [vmem:[%s303 + $0x6e8] sm:$0xff]
        %v1062 = vld [vmem:[%s303 + $0x6f0] sm:$0xff]
        %v1063 = vld [vmem:[%s303 + $0x6f8] sm:$0xff]
        %v1064 = vld [vmem:[%s303 + $0x700] sm:$0xff]
        %v1065 = vld [vmem:[%s303 + $0x708] sm:$0xff]
        %v1066 = vld [vmem:[%s303 + $0x710] sm:$0xff]
        %v1067 = vld [vmem:[%s303 + $0x718] sm:$0xff]
        %v1068 = vld [vmem:[%s303 + $0x720] sm:$0xff]
        %v1069 = vld [vmem:[%s303 + $0x728] sm:$0xff]
        %v1070 = vld [vmem:[%s303 + $0x730] sm:$0xff]
        %v1071 = vld [vmem:[%s303 + $0x738] sm:$0xff]
        %v1072 = vld [vmem:[%s303 + $0x740] sm:$0xff]
        %v1073 = vld [vmem:[%s303 + $0x748] sm:$0xff]
        %v1074 = vld [vmem:[%s303 + $0x750] sm:$0xff]
        %v1075 = vld [vmem:[%s303 + $0x758] sm:$0xff]
        %v1076 = vld [vmem:[%s303 + $0x760] sm:$0xff]
        %v1077 = vld [vmem:[%s303 + $0x768] sm:$0xff]
        %v1078 = vld [vmem:[%s303 + $0x770] sm:$0xff]
        %v1079 = vld [vmem:[%s303 + $0x778] sm:$0xff]
        %v1080 = vld [vmem:[%s303 + $0x780] sm:$0xff]
        %v1081 = vld [vmem:[%s303 + $0x788] sm:$0xff]
        %v1082 = vld [vmem:[%s303 + $0x790] sm:$0xff]
        %v1083 = vld [vmem:[%s303 + $0x798] sm:$0xff]
        %v1084 = vld [vmem:[%s303 + $0x7a0] sm:$0xff]
        %v1085 = vld [vmem:[%s303 + $0x7a8] sm:$0xff]
        %v1086 = vld [vmem:[%s303 + $0x7b0] sm:$0xff]
        %v1087 = vld [vmem:[%s303 + $0x7b8] sm:$0xff]
        %v1088 = vld [vmem:[%s303 + $0x7c0] sm:$0xff]
        %v1089 = vld [vmem:[%s303 + $0x7c8] sm:$0xff]
        %v1090 = vld [vmem:[%s303 + $0x7d0] sm:$0xff]
        %v1091 = vld [vmem:[%s303 + $0x7d8] sm:$0xff]
        %v1092 = vld [vmem:[%s303 + $0x7e0] sm:$0xff]
        %v1093 = vld [vmem:[%s303 + $0x7e8] sm:$0xff]
        %v1094 = vld [vmem:[%s303 + $0x7f0] sm:$0xff]
        %v1095 = vld [vmem:[%s303 + $0x7f8] sm:$0xff]
        %v1100 = vunpack.c.l.b16 %v836
        %v1101 = vunpack.c.h.b16 %v836
        %v1102 = vunpack.c.l.b16 %v837
        %v1103 = vunpack.c.h.b16 %v837
        %v1104 = vunpack.c.l.b16 %v838
        %v1105 = vunpack.c.h.b16 %v838
        %v1106 = vunpack.c.l.b16 %v839
        %v1107 = vunpack.c.h.b16 %v839
        %v1108 = vpack.c.b16 %v1104, %v1100
        %v1109 = vpack.c.b16 %v1105, %v1101
        %v1110 = vpack.c.b16 %v1106, %v1102
        %v1111 = vpack.c.b16 %v1107, %v1103
        %v1372 = vunpack.c.l.b16 %v840
        %v1373 = vunpack.c.h.b16 %v840
        %v1374 = vunpack.c.l.b16 %v841
        %v1375 = vunpack.c.h.b16 %v841
        %v1376 = vunpack.c.l.b16 %v842
        %v1377 = vunpack.c.h.b16 %v842
        %v1378 = vunpack.c.l.b16 %v843
        %v1379 = vunpack.c.h.b16 %v843
        %v1380 = vunpack.c.l.b16 %v844
        %v1381 = vunpack.c.h.b16 %v844
        %v1382 = vunpack.c.l.b16 %v845
        %v1383 = vunpack.c.h.b16 %v845
        %v1384 = vunpack.c.l.b16 %v846
        %v1385 = vunpack.c.h.b16 %v846
        %v1386 = vunpack.c.l.b16 %v847
        %v1387 = vunpack.c.h.b16 %v847
        %v1388 = vunpack.c.l.b16 %v848
        %v1389 = vunpack.c.h.b16 %v848
        %v1390 = vunpack.c.l.b16 %v849
        %v1391 = vunpack.c.h.b16 %v849
        %v1392 = vunpack.c.l.b16 %v850
        %v1393 = vunpack.c.h.b16 %v850
        %v1394 = vunpack.c.l.b16 %v851
        %v1395 = vunpack.c.h.b16 %v851
        %v1396 = vunpack.c.l.b16 %v852
        %v1397 = vunpack.c.h.b16 %v852
        %v1398 = vunpack.c.l.b16 %v853
        %v1399 = vunpack.c.h.b16 %v853
        %v1400 = vunpack.c.l.b16 %v854
        %v1401 = vunpack.c.h.b16 %v854
        %v1402 = vunpack.c.l.b16 %v855
        %v1403 = vunpack.c.h.b16 %v855
        %v1404 = vunpack.c.l.b16 %v856
        %v1405 = vunpack.c.h.b16 %v856
        %v1406 = vunpack.c.l.b16 %v857
        %v1407 = vunpack.c.h.b16 %v857
        %v1408 = vunpack.c.l.b16 %v858
        %v1409 = vunpack.c.h.b16 %v858
        %v1410 = vunpack.c.l.b16 %v859
        %v1411 = vunpack.c.h.b16 %v859
        %v1412 = vunpack.c.l.b16 %v860
        %v1413 = vunpack.c.h.b16 %v860
        %v1414 = vunpack.c.l.b16 %v861
        %v1415 = vunpack.c.h.b16 %v861
        %v1416 = vunpack.c.l.b16 %v862
        %v1417 = vunpack.c.h.b16 %v862
        %v1418 = vunpack.c.l.b16 %v863
        %v1419 = vunpack.c.h.b16 %v863
        %v1420 = vunpack.c.l.b16 %v864
        %v1421 = vunpack.c.h.b16 %v864
        %v1422 = vunpack.c.l.b16 %v865
        %v1423 = vunpack.c.h.b16 %v865
        %v1424 = vunpack.c.l.b16 %v866
        %v1425 = vunpack.c.h.b16 %v866
        %v1426 = vunpack.c.l.b16 %v867
        %v1427 = vunpack.c.h.b16 %v867
        %v1428 = vunpack.c.l.b16 %v868
        %v1429 = vunpack.c.h.b16 %v868
        %v1430 = vunpack.c.l.b16 %v869
        %v1431 = vunpack.c.h.b16 %v869
        %v1432 = vunpack.c.l.b16 %v870
        %v1433 = vunpack.c.h.b16 %v870
        %v1434 = vunpack.c.l.b16 %v871
        %v1435 = vunpack.c.h.b16 %v871
        %v1436 = vunpack.c.l.b16 %v872
        %v1437 = vunpack.c.h.b16 %v872
        %v1438 = vunpack.c.l.b16 %v873
        %v1439 = vunpack.c.h.b16 %v873
        %v1440 = vunpack.c.l.b16 %v874
        %v1441 = vunpack.c.h.b16 %v874
        %v1442 = vunpack.c.l.b16 %v875
        %v1443 = vunpack.c.h.b16 %v875
        %v1444 = vunpack.c.l.b16 %v876
        %v1445 = vunpack.c.h.b16 %v876
        %v1446 = vunpack.c.l.b16 %v877
        %v1447 = vunpack.c.h.b16 %v877
        %v1448 = vunpack.c.l.b16 %v878
        %v1449 = vunpack.c.h.b16 %v878
        %v1450 = vunpack.c.l.b16 %v879
        %v1451 = vunpack.c.h.b16 %v879
        %v1452 = vunpack.c.l.b16 %v880
        %v1453 = vunpack.c.h.b16 %v880
        %v1454 = vunpack.c.l.b16 %v881
        %v1455 = vunpack.c.h.b16 %v881
        %v1456 = vunpack.c.l.b16 %v882
        %v1457 = vunpack.c.h.b16 %v882
        %v1458 = vunpack.c.l.b16 %v883
        %v1459 = vunpack.c.h.b16 %v883
        %v1460 = vunpack.c.l.b16 %v884
        %v1461 = vunpack.c.h.b16 %v884
        %v1462 = vunpack.c.l.b16 %v885
        %v1463 = vunpack.c.h.b16 %v885
        %v1464 = vunpack.c.l.b16 %v886
        %v1465 = vunpack.c.h.b16 %v886
        %v1466 = vunpack.c.l.b16 %v887
        %v1467 = vunpack.c.h.b16 %v887
        %v1468 = vunpack.c.l.b16 %v888
        %v1469 = vunpack.c.h.b16 %v888
        %v1470 = vunpack.c.l.b16 %v889
        %v1471 = vunpack.c.h.b16 %v889
        %v1472 = vunpack.c.l.b16 %v890
        %v1473 = vunpack.c.h.b16 %v890
        %v1474 = vunpack.c.l.b16 %v891
        %v1475 = vunpack.c.h.b16 %v891
        %v1476 = vunpack.c.l.b16 %v892
        %v1477 = vunpack.c.h.b16 %v892
        %v1478 = vunpack.c.l.b16 %v893
        %v1479 = vunpack.c.h.b16 %v893
        %v1480 = vunpack.c.l.b16 %v894
        %v1481 = vunpack.c.h.b16 %v894
        %v1482 = vunpack.c.l.b16 %v895
        %v1483 = vunpack.c.h.b16 %v895
        %v1484 = vunpack.c.l.b16 %v896
        %v1485 = vunpack.c.h.b16 %v896
        %v1486 = vunpack.c.l.b16 %v897
        %v1487 = vunpack.c.h.b16 %v897
        %v1488 = vunpack.c.l.b16 %v898
        %v1489 = vunpack.c.h.b16 %v898
        %v1490 = vunpack.c.l.b16 %v899
        %v1491 = vunpack.c.h.b16 %v899
        %v1492 = vunpack.c.l.b16 %v900
        %v1493 = vunpack.c.h.b16 %v900
        %v1494 = vunpack.c.l.b16 %v901
        %v1495 = vunpack.c.h.b16 %v901
        %v1496 = vunpack.c.l.b16 %v902
        %v1497 = vunpack.c.h.b16 %v902
        %v1498 = vunpack.c.l.b16 %v903
        %v1499 = vunpack.c.h.b16 %v903
        %v1500 = vunpack.c.l.b16 %v904
        %v1501 = vunpack.c.h.b16 %v904
        %v1502 = vunpack.c.l.b16 %v905
        %v1503 = vunpack.c.h.b16 %v905
        %v1504 = vunpack.c.l.b16 %v906
        %v1505 = vunpack.c.h.b16 %v906
        %v1506 = vunpack.c.l.b16 %v907
        %v1507 = vunpack.c.h.b16 %v907
        %v1508 = vunpack.c.l.b16 %v908
        %v1509 = vunpack.c.h.b16 %v908
        %v1510 = vunpack.c.l.b16 %v909
        %v1511 = vunpack.c.h.b16 %v909
        %v1512 = vunpack.c.l.b16 %v910
        %v1513 = vunpack.c.h.b16 %v910
        %v1514 = vunpack.c.l.b16 %v911
        %v1515 = vunpack.c.h.b16 %v911
        %v1516 = vunpack.c.l.b16 %v912
        %v1517 = vunpack.c.h.b16 %v912
        %v1518 = vunpack.c.l.b16 %v913
        %v1519 = vunpack.c.h.b16 %v913
        %v1520 = vunpack.c.l.b16 %v914
        %v1521 = vunpack.c.h.b16 %v914
        %v1522 = vunpack.c.l.b16 %v915
        %v1523 = vunpack.c.h.b16 %v915
        %v1524 = vunpack.c.l.b16 %v916
        %v1525 = vunpack.c.h.b16 %v916
        %v1526 = vunpack.c.l.b16 %v917
        %v1527 = vunpack.c.h.b16 %v917
        %v1528 = vunpack.c.l.b16 %v918
        %v1529 = vunpack.c.h.b16 %v918
        %v1530 = vunpack.c.l.b16 %v919
        %v1531 = vunpack.c.h.b16 %v919
        %v1532 = vunpack.c.l.b16 %v920
        %v1533 = vunpack.c.h.b16 %v920
        %v1534 = vunpack.c.l.b16 %v921
        %v1535 = vunpack.c.h.b16 %v921
        %v1536 = vunpack.c.l.b16 %v922
        %v1537 = vunpack.c.h.b16 %v922
        %v1538 = vunpack.c.l.b16 %v923
        %v1539 = vunpack.c.h.b16 %v923
        %v1540 = vunpack.c.l.b16 %v924
        %v1541 = vunpack.c.h.b16 %v924
        %v1542 = vunpack.c.l.b16 %v925
        %v1543 = vunpack.c.h.b16 %v925
        %v1544 = vunpack.c.l.b16 %v926
        %v1545 = vunpack.c.h.b16 %v926
        %v1546 = vunpack.c.l.b16 %v927
        %v1547 = vunpack.c.h.b16 %v927
        %v1548 = vunpack.c.l.b16 %v928
        %v1549 = vunpack.c.h.b16 %v928
        %v1550 = vunpack.c.l.b16 %v929
        %v1551 = vunpack.c.h.b16 %v929
        %v1552 = vunpack.c.l.b16 %v930
        %v1553 = vunpack.c.h.b16 %v930
        %v1554 = vunpack.c.l.b16 %v931
        %v1555 = vunpack.c.h.b16 %v931
        %v1556 = vunpack.c.l.b16 %v932
        %v1557 = vunpack.c.h.b16 %v932
        %v1558 = vunpack.c.l.b16 %v933
        %v1559 = vunpack.c.h.b16 %v933
        %v1560 = vunpack.c.l.b16 %v934
        %v1561 = vunpack.c.h.b16 %v934
        %v1562 = vunpack.c.l.b16 %v935
        %v1563 = vunpack.c.h.b16 %v935
        %v1564 = vunpack.c.l.b16 %v936
        %v1565 = vunpack.c.h.b16 %v936
        %v1566 = vunpack.c.l.b16 %v937
        %v1567 = vunpack.c.h.b16 %v937
        %v1568 = vunpack.c.l.b16 %v938
        %v1569 = vunpack.c.h.b16 %v938
        %v1570 = vunpack.c.l.b16 %v939
        %v1571 = vunpack.c.h.b16 %v939
        %v1572 = vunpack.c.l.b16 %v940
        %v1573 = vunpack.c.h.b16 %v940
        %v1574 = vunpack.c.l.b16 %v941
        %v1575 = vunpack.c.h.b16 %v941
        %v1576 = vunpack.c.l.b16 %v942
        %v1577 = vunpack.c.h.b16 %v942
        %v1578 = vunpack.c.l.b16 %v943
        %v1579 = vunpack.c.h.b16 %v943
        %v1580 = vunpack.c.l.b16 %v944
        %v1581 = vunpack.c.h.b16 %v944
        %v1582 = vunpack.c.l.b16 %v945
        %v1583 = vunpack.c.h.b16 %v945
        %v1584 = vunpack.c.l.b16 %v946
        %v1585 = vunpack.c.h.b16 %v946
        %v1586 = vunpack.c.l.b16 %v947
        %v1587 = vunpack.c.h.b16 %v947
        %v1588 = vunpack.c.l.b16 %v948
        %v1589 = vunpack.c.h.b16 %v948
        %v1590 = vunpack.c.l.b16 %v949
        %v1591 = vunpack.c.h.b16 %v949
        %v1592 = vunpack.c.l.b16 %v950
        %v1593 = vunpack.c.h.b16 %v950
        %v1594 = vunpack.c.l.b16 %v951
        %v1595 = vunpack.c.h.b16 %v951
        %v1596 = vunpack.c.l.b16 %v952
        %v1597 = vunpack.c.h.b16 %v952
        %v1598 = vunpack.c.l.b16 %v953
        %v1599 = vunpack.c.h.b16 %v953
        %v1600 = vunpack.c.l.b16 %v954
        %v1601 = vunpack.c.h.b16 %v954
        %v1602 = vunpack.c.l.b16 %v955
        %v1603 = vunpack.c.h.b16 %v955
        %v1604 = vunpack.c.l.b16 %v956
        %v1605 = vunpack.c.h.b16 %v956
        %v1606 = vunpack.c.l.b16 %v957
        %v1607 = vunpack.c.h.b16 %v957
        %v1608 = vunpack.c.l.b16 %v958
        %v1609 = vunpack.c.h.b16 %v958
        %v1610 = vunpack.c.l.b16 %v959
        %v1611 = vunpack.c.h.b16 %v959
        %v1612 = vunpack.c.l.b16 %v960
        %v1613 = vunpack.c.h.b16 %v960
        %v1614 = vunpack.c.l.b16 %v961
        %v1615 = vunpack.c.h.b16 %v961
        %v1616 = vunpack.c.l.b16 %v962
        %v1617 = vunpack.c.h.b16 %v962
        %v1618 = vunpack.c.l.b16 %v963
        %v1619 = vunpack.c.h.b16 %v963
        %v1620 = vunpack.c.l.b16 %v964
        %v1621 = vunpack.c.h.b16 %v964
        %v1622 = vunpack.c.l.b16 %v965
        %v1623 = vunpack.c.h.b16 %v965
        %v1624 = vunpack.c.l.b16 %v966
        %v1625 = vunpack.c.h.b16 %v966
        %v1626 = vunpack.c.l.b16 %v967
        %v1627 = vunpack.c.h.b16 %v967
        %v1628 = vunpack.c.l.b16 %v968
        %v1629 = vunpack.c.h.b16 %v968
        %v1630 = vunpack.c.l.b16 %v969
        %v1631 = vunpack.c.h.b16 %v969
        %v1632 = vunpack.c.l.b16 %v970
        %v1633 = vunpack.c.h.b16 %v970
        %v1634 = vunpack.c.l.b16 %v971
        %v1635 = vunpack.c.h.b16 %v971
        %v1636 = vunpack.c.l.b16 %v972
        %v1637 = vunpack.c.h.b16 %v972
        %v1638 = vunpack.c.l.b16 %v973
        %v1639 = vunpack.c.h.b16 %v973
        %v1640 = vunpack.c.l.b16 %v974
        %v1641 = vunpack.c.h.b16 %v974
        %v1642 = vunpack.c.l.b16 %v975
        %v1643 = vunpack.c.h.b16 %v975
        %v1644 = vunpack.c.l.b16 %v976
        %v1645 = vunpack.c.h.b16 %v976
        %v1646 = vunpack.c.l.b16 %v977
        %v1647 = vunpack.c.h.b16 %v977
        %v1648 = vunpack.c.l.b16 %v978
        %v1649 = vunpack.c.h.b16 %v978
        %v1650 = vunpack.c.l.b16 %v979
        %v1651 = vunpack.c.h.b16 %v979
        %v1652 = vunpack.c.l.b16 %v980
        %v1653 = vunpack.c.h.b16 %v980
        %v1654 = vunpack.c.l.b16 %v981
        %v1655 = vunpack.c.h.b16 %v981
        %v1656 = vunpack.c.l.b16 %v982
        %v1657 = vunpack.c.h.b16 %v982
        %v1658 = vunpack.c.l.b16 %v983
        %v1659 = vunpack.c.h.b16 %v983
        %v1660 = vunpack.c.l.b16 %v984
        %v1661 = vunpack.c.h.b16 %v984
        %v1662 = vunpack.c.l.b16 %v985
        %v1663 = vunpack.c.h.b16 %v985
        %v1664 = vunpack.c.l.b16 %v986
        %v1665 = vunpack.c.h.b16 %v986
        %v1666 = vunpack.c.l.b16 %v987
        %v1667 = vunpack.c.h.b16 %v987
        %v1668 = vunpack.c.l.b16 %v988
        %v1669 = vunpack.c.h.b16 %v988
        %v1670 = vunpack.c.l.b16 %v989
        %v1671 = vunpack.c.h.b16 %v989
        %v1672 = vunpack.c.l.b16 %v990
        %v1673 = vunpack.c.h.b16 %v990
        %v1674 = vunpack.c.l.b16 %v991
        %v1675 = vunpack.c.h.b16 %v991
        %v1676 = vunpack.c.l.b16 %v992
        %v1677 = vunpack.c.h.b16 %v992
        %v1678 = vunpack.c.l.b16 %v993
        %v1679 = vunpack.c.h.b16 %v993
        %v1680 = vunpack.c.l.b16 %v994
        %v1681 = vunpack.c.h.b16 %v994
        %v1682 = vunpack.c.l.b16 %v995
        %v1683 = vunpack.c.h.b16 %v995
        %v1684 = vunpack.c.l.b16 %v996
        %v1685 = vunpack.c.h.b16 %v996
        %v1686 = vunpack.c.l.b16 %v997
        %v1687 = vunpack.c.h.b16 %v997
        %v1688 = vunpack.c.l.b16 %v998
        %v1689 = vunpack.c.h.b16 %v998
        %v1690 = vunpack.c.l.b16 %v999
        %v1691 = vunpack.c.h.b16 %v999
        %v1692 = vunpack.c.l.b16 %v1000
        %v1693 = vunpack.c.h.b16 %v1000
        %v1694 = vunpack.c.l.b16 %v1001
        %v1695 = vunpack.c.h.b16 %v1001
        %v1696 = vunpack.c.l.b16 %v1002
        %v1697 = vunpack.c.h.b16 %v1002
        %v1698 = vunpack.c.l.b16 %v1003
        %v1699 = vunpack.c.h.b16 %v1003
        %v1700 = vunpack.c.l.b16 %v1004
        %v1701 = vunpack.c.h.b16 %v1004
        %v1702 = vunpack.c.l.b16 %v1005
        %v1703 = vunpack.c.h.b16 %v1005
        %v1704 = vunpack.c.l.b16 %v1006
        %v1705 = vunpack.c.h.b16 %v1006
        %v1706 = vunpack.c.l.b16 %v1007
        %v1707 = vunpack.c.h.b16 %v1007
        %v1708 = vunpack.c.l.b16 %v1008
        %v1709 = vunpack.c.h.b16 %v1008
        %v1710 = vunpack.c.l.b16 %v1009
        %v1711 = vunpack.c.h.b16 %v1009
        %v1712 = vunpack.c.l.b16 %v1010
        %v1713 = vunpack.c.h.b16 %v1010
        %v1714 = vunpack.c.l.b16 %v1011
        %v1715 = vunpack.c.h.b16 %v1011
        %v1716 = vunpack.c.l.b16 %v1012
        %v1717 = vunpack.c.h.b16 %v1012
        %v1718 = vunpack.c.l.b16 %v1013
        %v1719 = vunpack.c.h.b16 %v1013
        %v1720 = vunpack.c.l.b16 %v1014
        %v1721 = vunpack.c.h.b16 %v1014
        %v1722 = vunpack.c.l.b16 %v1015
        %v1723 = vunpack.c.h.b16 %v1015
        %v1724 = vunpack.c.l.b16 %v1016
        %v1725 = vunpack.c.h.b16 %v1016
        %v1726 = vunpack.c.l.b16 %v1017
        %v1727 = vunpack.c.h.b16 %v1017
        %v1728 = vunpack.c.l.b16 %v1018
        %v1729 = vunpack.c.h.b16 %v1018
        %v1730 = vunpack.c.l.b16 %v1019
        %v1731 = vunpack.c.h.b16 %v1019
        %v1732 = vunpack.c.l.b16 %v1020
        %v1733 = vunpack.c.h.b16 %v1020
        %v1734 = vunpack.c.l.b16 %v1021
        %v1735 = vunpack.c.h.b16 %v1021
        %v1736 = vunpack.c.l.b16 %v1022
        %v1737 = vunpack.c.h.b16 %v1022
        %v1738 = vunpack.c.l.b16 %v1023
        %v1739 = vunpack.c.h.b16 %v1023
        %v1740 = vunpack.c.l.b16 %v1024
        %v1741 = vunpack.c.h.b16 %v1024
        %v1742 = vunpack.c.l.b16 %v1025
        %v1743 = vunpack.c.h.b16 %v1025
        %v1744 = vunpack.c.l.b16 %v1026
        %v1745 = vunpack.c.h.b16 %v1026
        %v1746 = vunpack.c.l.b16 %v1027
        %v1747 = vunpack.c.h.b16 %v1027
        %v1748 = vunpack.c.l.b16 %v1028
        %v1749 = vunpack.c.h.b16 %v1028
        %v1750 = vunpack.c.l.b16 %v1029
        %v1751 = vunpack.c.h.b16 %v1029
        %v1752 = vunpack.c.l.b16 %v1030
        %v1753 = vunpack.c.h.b16 %v1030
        %v1754 = vunpack.c.l.b16 %v1031
        %v1755 = vunpack.c.h.b16 %v1031
        %v1756 = vunpack.c.l.b16 %v1032
        %v1757 = vunpack.c.h.b16 %v1032
        %v1758 = vunpack.c.l.b16 %v1033
        %v1759 = vunpack.c.h.b16 %v1033
        %v1760 = vunpack.c.l.b16 %v1034
        %v1761 = vunpack.c.h.b16 %v1034
        %v1762 = vunpack.c.l.b16 %v1035
        %v1763 = vunpack.c.h.b16 %v1035
        %v1764 = vunpack.c.l.b16 %v1036
        %v1765 = vunpack.c.h.b16 %v1036
        %v1766 = vunpack.c.l.b16 %v1037
        %v1767 = vunpack.c.h.b16 %v1037
        %v1768 = vunpack.c.l.b16 %v1038
        %v1769 = vunpack.c.h.b16 %v1038
        %v1770 = vunpack.c.l.b16 %v1039
        %v1771 = vunpack.c.h.b16 %v1039
        %v1772 = vunpack.c.l.b16 %v1040
        %v1773 = vunpack.c.h.b16 %v1040
        %v1774 = vunpack.c.l.b16 %v1041
        %v1775 = vunpack.c.h.b16 %v1041
        %v1776 = vunpack.c.l.b16 %v1042
        %v1777 = vunpack.c.h.b16 %v1042
        %v1778 = vunpack.c.l.b16 %v1043
        %v1779 = vunpack.c.h.b16 %v1043
        %v1780 = vunpack.c.l.b16 %v1044
        %v1781 = vunpack.c.h.b16 %v1044
        %v1782 = vunpack.c.l.b16 %v1045
        %v1783 = vunpack.c.h.b16 %v1045
        %v1784 = vunpack.c.l.b16 %v1046
        %v1785 = vunpack.c.h.b16 %v1046
        %v1786 = vunpack.c.l.b16 %v1047
        %v1787 = vunpack.c.h.b16 %v1047
        %v1788 = vunpack.c.l.b16 %v1048
        %v1789 = vunpack.c.h.b16 %v1048
        %v1790 = vunpack.c.l.b16 %v1049
        %v1791 = vunpack.c.h.b16 %v1049
        %v1792 = vunpack.c.l.b16 %v1050
        %v1793 = vunpack.c.h.b16 %v1050
        %v1794 = vunpack.c.l.b16 %v1051
        %v1795 = vunpack.c.h.b16 %v1051
        %v1796 = vunpack.c.l.b16 %v1052
        %v1797 = vunpack.c.h.b16 %v1052
        %v1798 = vunpack.c.l.b16 %v1053
        %v1799 = vunpack.c.h.b16 %v1053
        %v1800 = vunpack.c.l.b16 %v1054
        %v1801 = vunpack.c.h.b16 %v1054
        %v1802 = vunpack.c.l.b16 %v1055
        %v1803 = vunpack.c.h.b16 %v1055
        %v1804 = vunpack.c.l.b16 %v1056
        %v1805 = vunpack.c.h.b16 %v1056
        %v1806 = vunpack.c.l.b16 %v1057
        %v1807 = vunpack.c.h.b16 %v1057
        %v1808 = vunpack.c.l.b16 %v1058
        %v1809 = vunpack.c.h.b16 %v1058
        %v1810 = vunpack.c.l.b16 %v1059
        %v1811 = vunpack.c.h.b16 %v1059
        %v1812 = vunpack.c.l.b16 %v1060
        %v1813 = vunpack.c.h.b16 %v1060
        %v1814 = vunpack.c.l.b16 %v1061
        %v1815 = vunpack.c.h.b16 %v1061
        %v1816 = vunpack.c.l.b16 %v1062
        %v1817 = vunpack.c.h.b16 %v1062
        %v1818 = vunpack.c.l.b16 %v1063
        %v1819 = vunpack.c.h.b16 %v1063
        %v1820 = vunpack.c.l.b16 %v1064
        %v1821 = vunpack.c.h.b16 %v1064
        %v1822 = vunpack.c.l.b16 %v1065
        %v1823 = vunpack.c.h.b16 %v1065
        %v1824 = vunpack.c.l.b16 %v1066
        %v1825 = vunpack.c.h.b16 %v1066
        %v1826 = vunpack.c.l.b16 %v1067
        %v1827 = vunpack.c.h.b16 %v1067
        %v1828 = vunpack.c.l.b16 %v1068
        %v1829 = vunpack.c.h.b16 %v1068
        %v1830 = vunpack.c.l.b16 %v1069
        %v1831 = vunpack.c.h.b16 %v1069
        %v1832 = vunpack.c.l.b16 %v1070
        %v1833 = vunpack.c.h.b16 %v1070
        %v1834 = vunpack.c.l.b16 %v1071
        %v1835 = vunpack.c.h.b16 %v1071
        %v1836 = vunpack.c.l.b16 %v1072
        %v1837 = vunpack.c.h.b16 %v1072
        %v1838 = vunpack.c.l.b16 %v1073
        %v1839 = vunpack.c.h.b16 %v1073
        %v1840 = vunpack.c.l.b16 %v1074
        %v1841 = vunpack.c.h.b16 %v1074
        %v1842 = vunpack.c.l.b16 %v1075
        %v1843 = vunpack.c.h.b16 %v1075
        %v1844 = vunpack.c.l.b16 %v1076
        %v1845 = vunpack.c.h.b16 %v1076
        %v1846 = vunpack.c.l.b16 %v1077
        %v1847 = vunpack.c.h.b16 %v1077
        %v1848 = vunpack.c.l.b16 %v1078
        %v1849 = vunpack.c.h.b16 %v1078
        %v1850 = vunpack.c.l.b16 %v1079
        %v1851 = vunpack.c.h.b16 %v1079
        %v1852 = vunpack.c.l.b16 %v1080
        %v1853 = vunpack.c.h.b16 %v1080
        %v1854 = vunpack.c.l.b16 %v1081
        %v1855 = vunpack.c.h.b16 %v1081
        %v1856 = vunpack.c.l.b16 %v1082
        %v1857 = vunpack.c.h.b16 %v1082
        %v1858 = vunpack.c.l.b16 %v1083
        %v1859 = vunpack.c.h.b16 %v1083
        %v1860 = vunpack.c.l.b16 %v1084
        %v1861 = vunpack.c.h.b16 %v1084
        %v1862 = vunpack.c.l.b16 %v1085
        %v1863 = vunpack.c.h.b16 %v1085
        %v1864 = vunpack.c.l.b16 %v1086
        %v1865 = vunpack.c.h.b16 %v1086
        %v1866 = vunpack.c.l.b16 %v1087
        %v1867 = vunpack.c.h.b16 %v1087
        %v1868 = vunpack.c.l.b16 %v1088
        %v1869 = vunpack.c.h.b16 %v1088
        %v1870 = vunpack.c.l.b16 %v1089
        %v1871 = vunpack.c.h.b16 %v1089
        %v1872 = vunpack.c.l.b16 %v1090
        %v1873 = vunpack.c.h.b16 %v1090
        %v1874 = vunpack.c.l.b16 %v1091
        %v1875 = vunpack.c.h.b16 %v1091
        %v1876 = vunpack.c.l.b16 %v1092
        %v1877 = vunpack.c.h.b16 %v1092
        %v1878 = vunpack.c.l.b16 %v1093
        %v1879 = vunpack.c.h.b16 %v1093
        %v1880 = vunpack.c.l.b16 %v1094
        %v1881 = vunpack.c.h.b16 %v1094
        %v1882 = vunpack.c.l.b16 %v1095
        %v1883 = vunpack.c.h.b16 %v1095
        %v1884 = vpack.c.b16 %v1380, %v1372
        %v1885 = vpack.c.b16 %v1381, %v1373
        %v1886 = vpack.c.b16 %v1382, %v1374
        %v1887 = vpack.c.b16 %v1383, %v1375
        %v1888 = vpack.c.b16 %v1384, %v1376
        %v1889 = vpack.c.b16 %v1385, %v1377
        %v1890 = vpack.c.b16 %v1386, %v1378
        %v1891 = vpack.c.b16 %v1387, %v1379
        %v1892 = vpack.c.b16 %v1396, %v1388
        %v1893 = vpack.c.b16 %v1397, %v1389
        %v1894 = vpack.c.b16 %v1398, %v1390
        %v1895 = vpack.c.b16 %v1399, %v1391
        %v1896 = vpack.c.b16 %v1400, %v1392
        %v1897 = vpack.c.b16 %v1401, %v1393
        %v1898 = vpack.c.b16 %v1402, %v1394
        %v1899 = vpack.c.b16 %v1403, %v1395
        %v1900 = vpack.c.b16 %v1412, %v1404
        %v1901 = vpack.c.b16 %v1413, %v1405
        %v1902 = vpack.c.b16 %v1414, %v1406
        %v1903 = vpack.c.b16 %v1415, %v1407
        %v1904 = vpack.c.b16 %v1416, %v1408
        %v1905 = vpack.c.b16 %v1417, %v1409
        %v1906 = vpack.c.b16 %v1418, %v1410
        %v1907 = vpack.c.b16 %v1419, %v1411
        %v1908 = vpack.c.b16 %v1428, %v1420
        %v1909 = vpack.c.b16 %v1429, %v1421
        %v1910 = vpack.c.b16 %v1430, %v1422
        %v1911 = vpack.c.b16 %v1431, %v1423
        %v1912 = vpack.c.b16 %v1432, %v1424
        %v1913 = vpack.c.b16 %v1433, %v1425
        %v1914 = vpack.c.b16 %v1434, %v1426
        %v1915 = vpack.c.b16 %v1435, %v1427
        %v1916 = vpack.c.b16 %v1444, %v1436
        %v1917 = vpack.c.b16 %v1445, %v1437
        %v1918 = vpack.c.b16 %v1446, %v1438
        %v1919 = vpack.c.b16 %v1447, %v1439
        %v1920 = vpack.c.b16 %v1448, %v1440
        %v1921 = vpack.c.b16 %v1449, %v1441
        %v1922 = vpack.c.b16 %v1450, %v1442
        %v1923 = vpack.c.b16 %v1451, %v1443
        %v1924 = vpack.c.b16 %v1460, %v1452
        %v1925 = vpack.c.b16 %v1461, %v1453
        %v1926 = vpack.c.b16 %v1462, %v1454
        %v1927 = vpack.c.b16 %v1463, %v1455
        %v1928 = vpack.c.b16 %v1464, %v1456
        %v1929 = vpack.c.b16 %v1465, %v1457
        %v1930 = vpack.c.b16 %v1466, %v1458
        %v1931 = vpack.c.b16 %v1467, %v1459
        %v1932 = vpack.c.b16 %v1476, %v1468
        %v1933 = vpack.c.b16 %v1477, %v1469
        %v1934 = vpack.c.b16 %v1478, %v1470
        %v1935 = vpack.c.b16 %v1479, %v1471
        %v1936 = vpack.c.b16 %v1480, %v1472
        %v1937 = vpack.c.b16 %v1481, %v1473
        %v1938 = vpack.c.b16 %v1482, %v1474
        %v1939 = vpack.c.b16 %v1483, %v1475
        %v1940 = vpack.c.b16 %v1492, %v1484
        %v1941 = vpack.c.b16 %v1493, %v1485
        %v1942 = vpack.c.b16 %v1494, %v1486
        %v1943 = vpack.c.b16 %v1495, %v1487
        %v1944 = vpack.c.b16 %v1496, %v1488
        %v1945 = vpack.c.b16 %v1497, %v1489
        %v1946 = vpack.c.b16 %v1498, %v1490
        %v1947 = vpack.c.b16 %v1499, %v1491
        %v1948 = vpack.c.b16 %v1508, %v1500
        %v1949 = vpack.c.b16 %v1509, %v1501
        %v1950 = vpack.c.b16 %v1510, %v1502
        %v1951 = vpack.c.b16 %v1511, %v1503
        %v1952 = vpack.c.b16 %v1512, %v1504
        %v1953 = vpack.c.b16 %v1513, %v1505
        %v1954 = vpack.c.b16 %v1514, %v1506
        %v1955 = vpack.c.b16 %v1515, %v1507
        %v1956 = vpack.c.b16 %v1524, %v1516
        %v1957 = vpack.c.b16 %v1525, %v1517
        %v1958 = vpack.c.b16 %v1526, %v1518
        %v1959 = vpack.c.b16 %v1527, %v1519
        %v1960 = vpack.c.b16 %v1528, %v1520
        %v1961 = vpack.c.b16 %v1529, %v1521
        %v1962 = vpack.c.b16 %v1530, %v1522
        %v1963 = vpack.c.b16 %v1531, %v1523
        %v1964 = vpack.c.b16 %v1540, %v1532
        %v1965 = vpack.c.b16 %v1541, %v1533
        %v1966 = vpack.c.b16 %v1542, %v1534
        %v1967 = vpack.c.b16 %v1543, %v1535
        %v1968 = vpack.c.b16 %v1544, %v1536
        %v1969 = vpack.c.b16 %v1545, %v1537
        %v1970 = vpack.c.b16 %v1546, %v1538
        %v1971 = vpack.c.b16 %v1547, %v1539
        %v1972 = vpack.c.b16 %v1556, %v1548
        %v1973 = vpack.c.b16 %v1557, %v1549
        %v1974 = vpack.c.b16 %v1558, %v1550
        %v1975 = vpack.c.b16 %v1559, %v1551
        %v1976 = vpack.c.b16 %v1560, %v1552
        %v1977 = vpack.c.b16 %v1561, %v1553
        %v1978 = vpack.c.b16 %v1562, %v1554
        %v1979 = vpack.c.b16 %v1563, %v1555
        %v1980 = vpack.c.b16 %v1572, %v1564
        %v1981 = vpack.c.b16 %v1573, %v1565
        %v1982 = vpack.c.b16 %v1574, %v1566
        %v1983 = vpack.c.b16 %v1575, %v1567
        %v1984 = vpack.c.b16 %v1576, %v1568
        %v1985 = vpack.c.b16 %v1577, %v1569
        %v1986 = vpack.c.b16 %v1578, %v1570
        %v1987 = vpack.c.b16 %v1579, %v1571
        %v1988 = vpack.c.b16 %v1588, %v1580
        %v1989 = vpack.c.b16 %v1589, %v1581
        %v1990 = vpack.c.b16 %v1590, %v1582
        %v1991 = vpack.c.b16 %v1591, %v1583
        %v1992 = vpack.c.b16 %v1592, %v1584
        %v1993 = vpack.c.b16 %v1593, %v1585
        %v1994 = vpack.c.b16 %v1594, %v1586
        %v1995 = vpack.c.b16 %v1595, %v1587
        %v1996 = vpack.c.b16 %v1604, %v1596
        %v1997 = vpack.c.b16 %v1605, %v1597
        %v1998 = vpack.c.b16 %v1606, %v1598
        %v1999 = vpack.c.b16 %v1607, %v1599
        %v2000 = vpack.c.b16 %v1608, %v1600
        %v2001 = vpack.c.b16 %v1609, %v1601
        %v2002 = vpack.c.b16 %v1610, %v1602
        %v2003 = vpack.c.b16 %v1611, %v1603
        %v2004 = vpack.c.b16 %v1620, %v1612
        %v2005 = vpack.c.b16 %v1621, %v1613
        %v2006 = vpack.c.b16 %v1622, %v1614
        %v2007 = vpack.c.b16 %v1623, %v1615
        %v2008 = vpack.c.b16 %v1624, %v1616
        %v2009 = vpack.c.b16 %v1625, %v1617
        %v2010 = vpack.c.b16 %v1626, %v1618
        %v2011 = vpack.c.b16 %v1627, %v1619
        %v2012 = vpack.c.b16 %v1636, %v1628
        %v2013 = vpack.c.b16 %v1637, %v1629
        %v2014 = vpack.c.b16 %v1638, %v1630
        %v2015 = vpack.c.b16 %v1639, %v1631
        %v2016 = vpack.c.b16 %v1640, %v1632
        %v2017 = vpack.c.b16 %v1641, %v1633
        %v2018 = vpack.c.b16 %v1642, %v1634
        %v2019 = vpack.c.b16 %v1643, %v1635
        %v2020 = vpack.c.b16 %v1652, %v1644
        %v2021 = vpack.c.b16 %v1653, %v1645
        %v2022 = vpack.c.b16 %v1654, %v1646
        %v2023 = vpack.c.b16 %v1655, %v1647
        %v2024 = vpack.c.b16 %v1656, %v1648
        %v2025 = vpack.c.b16 %v1657, %v1649
        %v2026 = vpack.c.b16 %v1658, %v1650
        %v2027 = vpack.c.b16 %v1659, %v1651
        %v2028 = vpack.c.b16 %v1668, %v1660
        %v2029 = vpack.c.b16 %v1669, %v1661
        %v2030 = vpack.c.b16 %v1670, %v1662
        %v2031 = vpack.c.b16 %v1671, %v1663
        %v2032 = vpack.c.b16 %v1672, %v1664
        %v2033 = vpack.c.b16 %v1673, %v1665
        %v2034 = vpack.c.b16 %v1674, %v1666
        %v2035 = vpack.c.b16 %v1675, %v1667
        %v2036 = vpack.c.b16 %v1684, %v1676
        %v2037 = vpack.c.b16 %v1685, %v1677
        %v2038 = vpack.c.b16 %v1686, %v1678
        %v2039 = vpack.c.b16 %v1687, %v1679
        %v2040 = vpack.c.b16 %v1688, %v1680
        %v2041 = vpack.c.b16 %v1689, %v1681
        %v2042 = vpack.c.b16 %v1690, %v1682
        %v2043 = vpack.c.b16 %v1691, %v1683
        %v2044 = vpack.c.b16 %v1700, %v1692
        %v2045 = vpack.c.b16 %v1701, %v1693
        %v2046 = vpack.c.b16 %v1702, %v1694
        %v2047 = vpack.c.b16 %v1703, %v1695
        %v2048 = vpack.c.b16 %v1704, %v1696
        %v2049 = vpack.c.b16 %v1705, %v1697
        %v2050 = vpack.c.b16 %v1706, %v1698
        %v2051 = vpack.c.b16 %v1707, %v1699
        %v2052 = vpack.c.b16 %v1716, %v1708
        %v2053 = vpack.c.b16 %v1717, %v1709
        %v2054 = vpack.c.b16 %v1718, %v1710
        %v2055 = vpack.c.b16 %v1719, %v1711
        %v2056 = vpack.c.b16 %v1720, %v1712
        %v2057 = vpack.c.b16 %v1721, %v1713
        %v2058 = vpack.c.b16 %v1722, %v1714
        %v2059 = vpack.c.b16 %v1723, %v1715
        %v2060 = vpack.c.b16 %v1732, %v1724
        %v2061 = vpack.c.b16 %v1733, %v1725
        %v2062 = vpack.c.b16 %v1734, %v1726
        %v2063 = vpack.c.b16 %v1735, %v1727
        %v2064 = vpack.c.b16 %v1736, %v1728
        %v2065 = vpack.c.b16 %v1737, %v1729
        %v2066 = vpack.c.b16 %v1738, %v1730
        %v2067 = vpack.c.b16 %v1739, %v1731
        %v2068 = vpack.c.b16 %v1748, %v1740
        %v2069 = vpack.c.b16 %v1749, %v1741
        %v2070 = vpack.c.b16 %v1750, %v1742
        %v2071 = vpack.c.b16 %v1751, %v1743
        %v2072 = vpack.c.b16 %v1752, %v1744
        %v2073 = vpack.c.b16 %v1753, %v1745
        %v2074 = vpack.c.b16 %v1754, %v1746
        %v2075 = vpack.c.b16 %v1755, %v1747
        %v2076 = vpack.c.b16 %v1764, %v1756
        %v2077 = vpack.c.b16 %v1765, %v1757
        %v2078 = vpack.c.b16 %v1766, %v1758
        %v2079 = vpack.c.b16 %v1767, %v1759
        %v2080 = vpack.c.b16 %v1768, %v1760
        %v2081 = vpack.c.b16 %v1769, %v1761
        %v2082 = vpack.c.b16 %v1770, %v1762
        %v2083 = vpack.c.b16 %v1771, %v1763
        %v2084 = vpack.c.b16 %v1780, %v1772
        %v2085 = vpack.c.b16 %v1781, %v1773
        %v2086 = vpack.c.b16 %v1782, %v1774
        %v2087 = vpack.c.b16 %v1783, %v1775
        %v2088 = vpack.c.b16 %v1784, %v1776
        %v2089 = vpack.c.b16 %v1785, %v1777
        %v2090 = vpack.c.b16 %v1786, %v1778
        %v2091 = vpack.c.b16 %v1787, %v1779
        %v2092 = vpack.c.b16 %v1796, %v1788
        %v2093 = vpack.c.b16 %v1797, %v1789
        %v2094 = vpack.c.b16 %v1798, %v1790
        %v2095 = vpack.c.b16 %v1799, %v1791
        %v2096 = vpack.c.b16 %v1800, %v1792
        %v2097 = vpack.c.b16 %v1801, %v1793
        %v2098 = vpack.c.b16 %v1802, %v1794
        %v2099 = vpack.c.b16 %v1803, %v1795
        %v2100 = vpack.c.b16 %v1812, %v1804
        %v2101 = vpack.c.b16 %v1813, %v1805
        %v2102 = vpack.c.b16 %v1814, %v1806
        %v2103 = vpack.c.b16 %v1815, %v1807
        %v2104 = vpack.c.b16 %v1816, %v1808
        %v2105 = vpack.c.b16 %v1817, %v1809
        %v2106 = vpack.c.b16 %v1818, %v1810
        %v2107 = vpack.c.b16 %v1819, %v1811
        %v2108 = vpack.c.b16 %v1828, %v1820
        %v2109 = vpack.c.b16 %v1829, %v1821
        %v2110 = vpack.c.b16 %v1830, %v1822
        %v2111 = vpack.c.b16 %v1831, %v1823
        %v2112 = vpack.c.b16 %v1832, %v1824
        %v2113 = vpack.c.b16 %v1833, %v1825
        %v2114 = vpack.c.b16 %v1834, %v1826
        %v2115 = vpack.c.b16 %v1835, %v1827
        %v2116 = vpack.c.b16 %v1844, %v1836
        %v2117 = vpack.c.b16 %v1845, %v1837
        %v2118 = vpack.c.b16 %v1846, %v1838
        %v2119 = vpack.c.b16 %v1847, %v1839
        %v2120 = vpack.c.b16 %v1848, %v1840
        %v2121 = vpack.c.b16 %v1849, %v1841
        %v2122 = vpack.c.b16 %v1850, %v1842
        %v2123 = vpack.c.b16 %v1851, %v1843
        %v2124 = vpack.c.b16 %v1860, %v1852
        %v2125 = vpack.c.b16 %v1861, %v1853
        %v2126 = vpack.c.b16 %v1862, %v1854
        %v2127 = vpack.c.b16 %v1863, %v1855
        %v2128 = vpack.c.b16 %v1864, %v1856
        %v2129 = vpack.c.b16 %v1865, %v1857
        %v2130 = vpack.c.b16 %v1866, %v1858
        %v2131 = vpack.c.b16 %v1867, %v1859
        %v2132 = vpack.c.b16 %v1876, %v1868
        %v2133 = vpack.c.b16 %v1877, %v1869
        %v2134 = vpack.c.b16 %v1878, %v1870
        %v2135 = vpack.c.b16 %v1879, %v1871
        %v2136 = vpack.c.b16 %v1880, %v1872
        %v2137 = vpack.c.b16 %v1881, %v1873
        %v2138 = vpack.c.b16 %v1882, %v1874
        %v2139 = vpack.c.b16 %v1883, %v1875
        %2396 = vmatprep.subr.bf16.mxu0 %v1941
        %2397 = vmatpush1.bf16.msra.mxu0 %v1940
        %2398 = vmatprep.subr.bf16.mxu0 %v1933
        %2399 = vmatpush1.bf16.msra.mxu0 %v1932
        %2400 = vmatprep.subr.bf16.mxu0 %v1925
        %2401 = vmatpush1.bf16.msra.mxu0 %v1924
        %2402 = vmatprep.subr.bf16.mxu0 %v1917
        %2403 = vmatpush1.bf16.msra.mxu0 %v1916
        %2404 = vmatprep.subr.bf16.mxu0 %v1909
        %2405 = vmatpush1.bf16.msra.mxu0 %v1908
        %2406 = vmatprep.subr.bf16.mxu0 %v1901
        %2407 = vmatpush1.bf16.msra.mxu0 %v1900
        %2408 = vmatprep.subr.bf16.mxu0 %v1893
        %2409 = vmatpush1.bf16.msra.mxu0 %v1892
        %2410 = vmatprep.subr.bf16.mxu0 %v1885
        %2411 = vmatpush1.bf16.msra.mxu0 %v1884
        %2412 = vmatprep.subr.bf16.mxu0 %v2005
        %2413 = vmatpush2.bf16.msra.mxu0 %v2004
        %2414 = vmatprep.subr.bf16.mxu0 %v1997
        %2415 = vmatpush2.bf16.msra.mxu0 %v1996
        %2416 = vmatprep.subr.bf16.mxu0 %v1989
        %2417 = vmatpush2.bf16.msra.mxu0 %v1988
        %2418 = vmatprep.subr.bf16.mxu0 %v1981
        %2419 = vmatpush2.bf16.msra.mxu0 %v1980
        %2420 = vmatprep.subr.bf16.mxu0 %v1973
        %2421 = vmatpush2.bf16.msra.mxu0 %v1972
        %2422 = vmatprep.subr.bf16.mxu0 %v1965
        %2423 = vmatpush2.bf16.msra.mxu0 %v1964
        %2424 = vmatprep.subr.bf16.mxu0 %v1957
        %2425 = vmatpush2.bf16.msra.mxu0 %v1956
        %2426 = vmatprep.subr.bf16.mxu0 %v1949
        %2427 = vmatpush2.bf16.msra.mxu0 %v1948
        %2428 = vmatprep.mubr.bf16.mxu0 %v1109
        %2429 = vmatmul.mubr.bf16.gmra.mxu0 %v1108
        %v2430 = vpop.f32.mrf.mxu0
        %v2431 = vadd.f32 0.0, %v2430
        %v2432 = vpop.f32.mrf.mxu0
        %v2433 = vadd.f32 0.0, %v2432
        %v2434 = vpop.f32.mrf.mxu0
        %v2435 = vadd.f32 0.0, %v2434
        %v2436 = vpop.f32.mrf.mxu0
        %v2437 = vadd.f32 0.0, %v2436
        %2438 = vdwg.mxu0
        %2439 = vmatprep.subr.bf16.mxu0 %v2069
        %2440 = vmatpush1.bf16.msra.mxu0 %v2068
        %2441 = vmatprep.subr.bf16.mxu0 %v2061
        %2442 = vmatpush1.bf16.msra.mxu0 %v2060
        %2443 = vmatprep.subr.bf16.mxu0 %v2053
        %2444 = vmatpush1.bf16.msra.mxu0 %v2052
        %2445 = vmatprep.subr.bf16.mxu0 %v2045
        %2446 = vmatpush1.bf16.msra.mxu0 %v2044
        %2447 = vmatprep.subr.bf16.mxu0 %v2037
        %2448 = vmatpush1.bf16.msra.mxu0 %v2036
        %2449 = vmatprep.subr.bf16.mxu0 %v2029
        %2450 = vmatpush1.bf16.msra.mxu0 %v2028
        %2451 = vmatprep.subr.bf16.mxu0 %v2021
        %2452 = vmatpush1.bf16.msra.mxu0 %v2020
        %2453 = vmatprep.subr.bf16.mxu0 %v2013
        %2454 = vmatpush1.bf16.msra.mxu0 %v2012
        %2455 = vmatprep.subr.bf16.mxu0 %v2133
        %2456 = vmatpush2.bf16.msra.mxu0 %v2132
        %2457 = vmatprep.subr.bf16.mxu0 %v2125
        %2458 = vmatpush2.bf16.msra.mxu0 %v2124
        %2459 = vmatprep.subr.bf16.mxu0 %v2117
        %2460 = vmatpush2.bf16.msra.mxu0 %v2116
        %2461 = vmatprep.subr.bf16.mxu0 %v2109
        %2462 = vmatpush2.bf16.msra.mxu0 %v2108
        %2463 = vmatprep.subr.bf16.mxu0 %v2101
        %2464 = vmatpush2.bf16.msra.mxu0 %v2100
        %2465 = vmatprep.subr.bf16.mxu0 %v2093
        %2466 = vmatpush2.bf16.msra.mxu0 %v2092
        %2467 = vmatprep.subr.bf16.mxu0 %v2085
        %2468 = vmatpush2.bf16.msra.mxu0 %v2084
        %2469 = vmatprep.subr.bf16.mxu0 %v2077
        %2470 = vmatpush2.bf16.msra.mxu0 %v2076
        %2471 = vmatprep.mubr.bf16.mxu0 %v1111
        %2472 = vmatmul.mubr.bf16.gmra.mxu0 %v1110
        %v2473 = vpop.f32.mrf.mxu0
        %v2474 = vadd.f32 %v2431, %v2473
        %v2475 = vpop.f32.mrf.mxu0
        %v2476 = vadd.f32 %v2433, %v2475
        %v2477 = vpop.f32.mrf.mxu0
        %v2478 = vadd.f32 %v2435, %v2477
        %v2479 = vpop.f32.mrf.mxu0
        %v2480 = vadd.f32 %v2437, %v2479
        %2481 = vdwg.mxu0
        %2482 = vmatprep.subr.bf16.mxu0 %v1943
        %2483 = vmatpush1.bf16.msra.mxu0 %v1942
        %2484 = vmatprep.subr.bf16.mxu0 %v1935
        %2485 = vmatpush1.bf16.msra.mxu0 %v1934
        %2486 = vmatprep.subr.bf16.mxu0 %v1927
        %2487 = vmatpush1.bf16.msra.mxu0 %v1926
        %2488 = vmatprep.subr.bf16.mxu0 %v1919
        %2489 = vmatpush1.bf16.msra.mxu0 %v1918
        %2490 = vmatprep.subr.bf16.mxu0 %v1911
        %2491 = vmatpush1.bf16.msra.mxu0 %v1910
        %2492 = vmatprep.subr.bf16.mxu0 %v1903
        %2493 = vmatpush1.bf16.msra.mxu0 %v1902
        %2494 = vmatprep.subr.bf16.mxu0 %v1895
        %2495 = vmatpush1.bf16.msra.mxu0 %v1894
        %2496 = vmatprep.subr.bf16.mxu0 %v1887
        %2497 = vmatpush1.bf16.msra.mxu0 %v1886
        %2498 = vmatprep.subr.bf16.mxu0 %v2007
        %2499 = vmatpush2.bf16.msra.mxu0 %v2006
        %2500 = vmatprep.subr.bf16.mxu0 %v1999
        %2501 = vmatpush2.bf16.msra.mxu0 %v1998
        %2502 = vmatprep.subr.bf16.mxu0 %v1991
        %2503 = vmatpush2.bf16.msra.mxu0 %v1990
        %2504 = vmatprep.subr.bf16.mxu0 %v1983
        %2505 = vmatpush2.bf16.msra.mxu0 %v1982
        %2506 = vmatprep.subr.bf16.mxu0 %v1975
        %2507 = vmatpush2.bf16.msra.mxu0 %v1974
        %2508 = vmatprep.subr.bf16.mxu0 %v1967
        %2509 = vmatpush2.bf16.msra.mxu0 %v1966
        %2510 = vmatprep.subr.bf16.mxu0 %v1959
        %2511 = vmatpush2.bf16.msra.mxu0 %v1958
        %2512 = vmatprep.subr.bf16.mxu0 %v1951
        %2513 = vmatpush2.bf16.msra.mxu0 %v1950
        %2514 = vmatprep.mubr.bf16.mxu0 %v1109
        %2515 = vmatmul.mubr.bf16.gmra.mxu0 %v1108
        %v2516 = vpop.f32.mrf.mxu0
        %v2517 = vadd.f32 0.0, %v2516
        %v2518 = vpop.f32.mrf.mxu0
        %v2519 = vadd.f32 0.0, %v2518
        %v2520 = vpop.f32.mrf.mxu0
        %v2521 = vadd.f32 0.0, %v2520
        %v2522 = vpop.f32.mrf.mxu0
        %v2523 = vadd.f32 0.0, %v2522
        %2524 = vdwg.mxu0
        %2525 = vmatprep.subr.bf16.mxu0 %v2071
        %2526 = vmatpush1.bf16.msra.mxu0 %v2070
        %2527 = vmatprep.subr.bf16.mxu0 %v2063
        %2528 = vmatpush1.bf16.msra.mxu0 %v2062
        %2529 = vmatprep.subr.bf16.mxu0 %v2055
        %2530 = vmatpush1.bf16.msra.mxu0 %v2054
        %2531 = vmatprep.subr.bf16.mxu0 %v2047
        %2532 = vmatpush1.bf16.msra.mxu0 %v2046
        %2533 = vmatprep.subr.bf16.mxu0 %v2039
        %2534 = vmatpush1.bf16.msra.mxu0 %v2038
        %2535 = vmatprep.subr.bf16.mxu0 %v2031
        %2536 = vmatpush1.bf16.msra.mxu0 %v2030
        %2537 = vmatprep.subr.bf16.mxu0 %v2023
        %2538 = vmatpush1.bf16.msra.mxu0 %v2022
        %2539 = vmatprep.subr.bf16.mxu0 %v2015
        %2540 = vmatpush1.bf16.msra.mxu0 %v2014
        %2541 = vmatprep.subr.bf16.mxu0 %v2135
        %2542 = vmatpush2.bf16.msra.mxu0 %v2134
        %2543 = vmatprep.subr.bf16.mxu0 %v2127
        %2544 = vmatpush2.bf16.msra.mxu0 %v2126
        %2545 = vmatprep.subr.bf16.mxu0 %v2119
        %2546 = vmatpush2.bf16.msra.mxu0 %v2118
        %2547 = vmatprep.subr.bf16.mxu0 %v2111
        %2548 = vmatpush2.bf16.msra.mxu0 %v2110
        %2549 = vmatprep.subr.bf16.mxu0 %v2103
        %2550 = vmatpush2.bf16.msra.mxu0 %v2102
        %2551 = vmatprep.subr.bf16.mxu0 %v2095
        %2552 = vmatpush2.bf16.msra.mxu0 %v2094
        %2553 = vmatprep.subr.bf16.mxu0 %v2087
        %2554 = vmatpush2.bf16.msra.mxu0 %v2086
        %2555 = vmatprep.subr.bf16.mxu0 %v2079
        %2556 = vmatpush2.bf16.msra.mxu0 %v2078
        %2557 = vmatprep.mubr.bf16.mxu0 %v1111
        %2558 = vmatmul.mubr.bf16.gmra.mxu0 %v1110
        %v2559 = vpop.f32.mrf.mxu0
        %v2560 = vadd.f32 %v2517, %v2559
        %v2561 = vpop.f32.mrf.mxu0
        %v2562 = vadd.f32 %v2519, %v2561
        %v2563 = vpop.f32.mrf.mxu0
        %v2564 = vadd.f32 %v2521, %v2563
        %v2565 = vpop.f32.mrf.mxu0
        %v2566 = vadd.f32 %v2523, %v2565
        %2567 = vdwg.mxu0
        %2568 = vmatprep.subr.bf16.mxu0 %v1945
        %2569 = vmatpush1.bf16.msra.mxu0 %v1944
        %2570 = vmatprep.subr.bf16.mxu0 %v1937
        %2571 = vmatpush1.bf16.msra.mxu0 %v1936
        %2572 = vmatprep.subr.bf16.mxu0 %v1929
        %2573 = vmatpush1.bf16.msra.mxu0 %v1928
        %2574 = vmatprep.subr.bf16.mxu0 %v1921
        %2575 = vmatpush1.bf16.msra.mxu0 %v1920
        %2576 = vmatprep.subr.bf16.mxu0 %v1913
        %2577 = vmatpush1.bf16.msra.mxu0 %v1912
        %2578 = vmatprep.subr.bf16.mxu0 %v1905
        %2579 = vmatpush1.bf16.msra.mxu0 %v1904
        %2580 = vmatprep.subr.bf16.mxu0 %v1897
        %2581 = vmatpush1.bf16.msra.mxu0 %v1896
        %2582 = vmatprep.subr.bf16.mxu0 %v1889
        %2583 = vmatpush1.bf16.msra.mxu0 %v1888
        %2584 = vmatprep.subr.bf16.mxu0 %v2009
        %2585 = vmatpush2.bf16.msra.mxu0 %v2008
        %2586 = vmatprep.subr.bf16.mxu0 %v2001
        %2587 = vmatpush2.bf16.msra.mxu0 %v2000
        %2588 = vmatprep.subr.bf16.mxu0 %v1993
        %2589 = vmatpush2.bf16.msra.mxu0 %v1992
        %2590 = vmatprep.subr.bf16.mxu0 %v1985
        %2591 = vmatpush2.bf16.msra.mxu0 %v1984
        %2592 = vmatprep.subr.bf16.mxu0 %v1977
        %2593 = vmatpush2.bf16.msra.mxu0 %v1976
        %2594 = vmatprep.subr.bf16.mxu0 %v1969
        %2595 = vmatpush2.bf16.msra.mxu0 %v1968
        %2596 = vmatprep.subr.bf16.mxu0 %v1961
        %2597 = vmatpush2.bf16.msra.mxu0 %v1960
        %2598 = vmatprep.subr.bf16.mxu0 %v1953
        %2599 = vmatpush2.bf16.msra.mxu0 %v1952
        %2600 = vmatprep.mubr.bf16.mxu0 %v1109
        %2601 = vmatmul.mubr.bf16.gmra.mxu0 %v1108
        %v2602 = vpop.f32.mrf.mxu0
        %v2603 = vadd.f32 0.0, %v2602
        %v2604 = vpop.f32.mrf.mxu0
        %v2605 = vadd.f32 0.0, %v2604
        %v2606 = vpop.f32.mrf.mxu0
        %v2607 = vadd.f32 0.0, %v2606
        %v2608 = vpop.f32.mrf.mxu0
        %v2609 = vadd.f32 0.0, %v2608
        %2610 = vdwg.mxu0
        %2611 = vmatprep.subr.bf16.mxu0 %v2073
        %2612 = vmatpush1.bf16.msra.mxu0 %v2072
        %2613 = vmatprep.subr.bf16.mxu0 %v2065
        %2614 = vmatpush1.bf16.msra.mxu0 %v2064
        %2615 = vmatprep.subr.bf16.mxu0 %v2057
        %2616 = vmatpush1.bf16.msra.mxu0 %v2056
        %2617 = vmatprep.subr.bf16.mxu0 %v2049
        %2618 = vmatpush1.bf16.msra.mxu0 %v2048
        %2619 = vmatprep.subr.bf16.mxu0 %v2041
        %2620 = vmatpush1.bf16.msra.mxu0 %v2040
        %2621 = vmatprep.subr.bf16.mxu0 %v2033
        %2622 = vmatpush1.bf16.msra.mxu0 %v2032
        %2623 = vmatprep.subr.bf16.mxu0 %v2025
        %2624 = vmatpush1.bf16.msra.mxu0 %v2024
        %2625 = vmatprep.subr.bf16.mxu0 %v2017
        %2626 = vmatpush1.bf16.msra.mxu0 %v2016
        %2627 = vmatprep.subr.bf16.mxu0 %v2137
        %2628 = vmatpush2.bf16.msra.mxu0 %v2136
        %2629 = vmatprep.subr.bf16.mxu0 %v2129
        %2630 = vmatpush2.bf16.msra.mxu0 %v2128
        %2631 = vmatprep.subr.bf16.mxu0 %v2121
        %2632 = vmatpush2.bf16.msra.mxu0 %v2120
        %2633 = vmatprep.subr.bf16.mxu0 %v2113
        %2634 = vmatpush2.bf16.msra.mxu0 %v2112
        %2635 = vmatprep.subr.bf16.mxu0 %v2105
        %2636 = vmatpush2.bf16.msra.mxu0 %v2104
        %2637 = vmatprep.subr.bf16.mxu0 %v2097
        %2638 = vmatpush2.bf16.msra.mxu0 %v2096
        %2639 = vmatprep.subr.bf16.mxu0 %v2089
        %2640 = vmatpush2.bf16.msra.mxu0 %v2088
        %2641 = vmatprep.subr.bf16.mxu0 %v2081
        %2642 = vmatpush2.bf16.msra.mxu0 %v2080
        %2643 = vmatprep.mubr.bf16.mxu0 %v1111
        %2644 = vmatmul.mubr.bf16.gmra.mxu0 %v1110
        %v2645 = vpop.f32.mrf.mxu0
        %v2646 = vadd.f32 %v2603, %v2645
        %v2647 = vpop.f32.mrf.mxu0
        %v2648 = vadd.f32 %v2605, %v2647
        %v2649 = vpop.f32.mrf.mxu0
        %v2650 = vadd.f32 %v2607, %v2649
        %v2651 = vpop.f32.mrf.mxu0
        %v2652 = vadd.f32 %v2609, %v2651
        %2653 = vdwg.mxu0
        %2654 = vmatprep.subr.bf16.mxu0 %v1947
        %2655 = vmatpush1.bf16.msra.mxu0 %v1946
        %2656 = vmatprep.subr.bf16.mxu0 %v1939
        %2657 = vmatpush1.bf16.msra.mxu0 %v1938
        %2658 = vmatprep.subr.bf16.mxu0 %v1931
        %2659 = vmatpush1.bf16.msra.mxu0 %v1930
        %2660 = vmatprep.subr.bf16.mxu0 %v1923
        %2661 = vmatpush1.bf16.msra.mxu0 %v1922
        %2662 = vmatprep.subr.bf16.mxu0 %v1915
        %2663 = vmatpush1.bf16.msra.mxu0 %v1914
        %2664 = vmatprep.subr.bf16.mxu0 %v1907
        %2665 = vmatpush1.bf16.msra.mxu0 %v1906
        %2666 = vmatprep.subr.bf16.mxu0 %v1899
        %2667 = vmatpush1.bf16.msra.mxu0 %v1898
        %2668 = vmatprep.subr.bf16.mxu0 %v1891
        %2669 = vmatpush1.bf16.msra.mxu0 %v1890
        %2670 = vmatprep.subr.bf16.mxu0 %v2011
        %2671 = vmatpush2.bf16.msra.mxu0 %v2010
        %2672 = vmatprep.subr.bf16.mxu0 %v2003
        %2673 = vmatpush2.bf16.msra.mxu0 %v2002
        %2674 = vmatprep.subr.bf16.mxu0 %v1995
        %2675 = vmatpush2.bf16.msra.mxu0 %v1994
        %2676 = vmatprep.subr.bf16.mxu0 %v1987
        %2677 = vmatpush2.bf16.msra.mxu0 %v1986
        %2678 = vmatprep.subr.bf16.mxu0 %v1979
        %2679 = vmatpush2.bf16.msra.mxu0 %v1978
        %2680 = vmatprep.subr.bf16.mxu0 %v1971
        %2681 = vmatpush2.bf16.msra.mxu0 %v1970
        %2682 = vmatprep.subr.bf16.mxu0 %v1963
        %2683 = vmatpush2.bf16.msra.mxu0 %v1962
        %2684 = vmatprep.subr.bf16.mxu0 %v1955
        %2685 = vmatpush2.bf16.msra.mxu0 %v1954
        %2686 = vmatprep.mubr.bf16.mxu0 %v1109
        %2687 = vmatmul.mubr.bf16.gmra.mxu0 %v1108
        %v2688 = vpop.f32.mrf.mxu0
        %v2689 = vadd.f32 0.0, %v2688
        %v2690 = vpop.f32.mrf.mxu0
        %v2691 = vadd.f32 0.0, %v2690
        %v2692 = vpop.f32.mrf.mxu0
        %v2693 = vadd.f32 0.0, %v2692
        %v2694 = vpop.f32.mrf.mxu0
        %v2695 = vadd.f32 0.0, %v2694
        %2696 = vdwg.mxu0
        %2697 = vmatprep.subr.bf16.mxu0 %v2075
        %2698 = vmatpush1.bf16.msra.mxu0 %v2074
        %2699 = vmatprep.subr.bf16.mxu0 %v2067
        %2700 = vmatpush1.bf16.msra.mxu0 %v2066
        %2701 = vmatprep.subr.bf16.mxu0 %v2059
        %2702 = vmatpush1.bf16.msra.mxu0 %v2058
        %2703 = vmatprep.subr.bf16.mxu0 %v2051
        %2704 = vmatpush1.bf16.msra.mxu0 %v2050
        %2705 = vmatprep.subr.bf16.mxu0 %v2043
        %2706 = vmatpush1.bf16.msra.mxu0 %v2042
        %2707 = vmatprep.subr.bf16.mxu0 %v2035
        %2708 = vmatpush1.bf16.msra.mxu0 %v2034
        %2709 = vmatprep.subr.bf16.mxu0 %v2027
        %2710 = vmatpush1.bf16.msra.mxu0 %v2026
        %2711 = vmatprep.subr.bf16.mxu0 %v2019
        %2712 = vmatpush1.bf16.msra.mxu0 %v2018
        %2713 = vmatprep.subr.bf16.mxu0 %v2139
        %2714 = vmatpush2.bf16.msra.mxu0 %v2138
        %2715 = vmatprep.subr.bf16.mxu0 %v2131
        %2716 = vmatpush2.bf16.msra.mxu0 %v2130
        %2717 = vmatprep.subr.bf16.mxu0 %v2123
        %2718 = vmatpush2.bf16.msra.mxu0 %v2122
        %2719 = vmatprep.subr.bf16.mxu0 %v2115
        %2720 = vmatpush2.bf16.msra.mxu0 %v2114
        %2721 = vmatprep.subr.bf16.mxu0 %v2107
        %2722 = vmatpush2.bf16.msra.mxu0 %v2106
        %2723 = vmatprep.subr.bf16.mxu0 %v2099
        %2724 = vmatpush2.bf16.msra.mxu0 %v2098
        %2725 = vmatprep.subr.bf16.mxu0 %v2091
        %2726 = vmatpush2.bf16.msra.mxu0 %v2090
        %2727 = vmatprep.subr.bf16.mxu0 %v2083
        %2728 = vmatpush2.bf16.msra.mxu0 %v2082
        %2729 = vmatprep.mubr.bf16.mxu0 %v1111
        %2730 = vmatmul.mubr.bf16.gmra.mxu0 %v1110
        %v2731 = vpop.f32.mrf.mxu0
        %v2732 = vadd.f32 %v2689, %v2731
        %v2733 = vpop.f32.mrf.mxu0
        %v2734 = vadd.f32 %v2691, %v2733
        %v2735 = vpop.f32.mrf.mxu0
        %v2736 = vadd.f32 %v2693, %v2735
        %v2737 = vpop.f32.mrf.mxu0
        %v2738 = vadd.f32 %v2695, %v2737
        %2739 = vdwg.mxu0
        // Predicated region
        $region73: #{mi_estimator_forward.1} parent=47 // pred_check
          %p2740 = pneg %p339
        $region74: #{mi_estimator_forward.1} parent=47 // pred_check_branch
          %2742 = sbr.rel (%p2740) target = $region76
        $region75: #{mi_estimator_forward.1} parent=47 // pred_region
          %2743 = vst [vmem:[#allocation3] sm:$0xff] %v2474
          %2744 = vst [vmem:[#allocation3 + $0x8] sm:$0xff] %v2476
          %2745 = vst [vmem:[#allocation3 + $0x10] sm:$0xff] %v2560
          %2746 = vst [vmem:[#allocation3 + $0x18] sm:$0xff] %v2562
          %2747 = vst [vmem:[#allocation3 + $0x20] sm:$0xff] %v2646
          %2748 = vst [vmem:[#allocation3 + $0x28] sm:$0xff] %v2648
          %2749 = vst [vmem:[#allocation3 + $0x30] sm:$0xff] %v2732
          %2750 = vst [vmem:[#allocation3 + $0x38] sm:$0xff] %v2734
          %2751 = vst [vmem:[#allocation3 + $0x40] sm:$0xff] %v2478
          %2752 = vst [vmem:[#allocation3 + $0x48] sm:$0xff] %v2480
          %2753 = vst [vmem:[#allocation3 + $0x50] sm:$0xff] %v2564
          %2754 = vst [vmem:[#allocation3 + $0x58] sm:$0xff] %v2566
          %2755 = vst [vmem:[#allocation3 + $0x60] sm:$0xff] %v2650
          %2756 = vst [vmem:[#allocation3 + $0x68] sm:$0xff] %v2652
          %2757 = vst [vmem:[#allocation3 + $0x70] sm:$0xff] %v2736
          %2758 = vst [vmem:[#allocation3 + $0x78] sm:$0xff] %v2738
        $region76: #{mi_estimator_forward.1} parent=47 // pred_fallthru
          _
        %p2759 = scmp.ne.s32.totalorder %s23, 0
        // Predicated region
        $region77: #{mi_estimator_forward.1} parent=47 // pred_check
          %p2760 = pneg %p2759
        $region78: #{mi_estimator_forward.1} parent=47 // pred_check_branch
          %2762 = sbr.rel (%p2760) target = $region80
        $region79: #{mi_estimator_forward.1} parent=47 // pred_region
          %v2763 = vld [vmem:[#allocation3] sm:$0xff]
          %v2764 = vld [vmem:[#allocation3 + $0x8] sm:$0xff]
          %v2765 = vld [vmem:[#allocation3 + $0x10] sm:$0xff]
          %v2766 = vld [vmem:[#allocation3 + $0x18] sm:$0xff]
          %v2767 = vld [vmem:[#allocation3 + $0x20] sm:$0xff]
          %v2768 = vld [vmem:[#allocation3 + $0x28] sm:$0xff]
          %v2769 = vld [vmem:[#allocation3 + $0x30] sm:$0xff]
          %v2770 = vld [vmem:[#allocation3 + $0x38] sm:$0xff]
          %v2771 = vld [vmem:[#allocation3 + $0x40] sm:$0xff]
          %v2772 = vld [vmem:[#allocation3 + $0x48] sm:$0xff]
          %v2773 = vld [vmem:[#allocation3 + $0x50] sm:$0xff]
          %v2774 = vld [vmem:[#allocation3 + $0x58] sm:$0xff]
          %v2775 = vld [vmem:[#allocation3 + $0x60] sm:$0xff]
          %v2776 = vld [vmem:[#allocation3 + $0x68] sm:$0xff]
          %v2777 = vld [vmem:[#allocation3 + $0x70] sm:$0xff]
          %v2778 = vld [vmem:[#allocation3 + $0x78] sm:$0xff]
          %v2779 = vadd.f32 %v2763, %v2474
          %v2780 = vadd.f32 %v2764, %v2476
          %v2781 = vadd.f32 %v2765, %v2560
          %v2782 = vadd.f32 %v2766, %v2562
          %v2783 = vadd.f32 %v2767, %v2646
          %v2784 = vadd.f32 %v2768, %v2648
          %v2785 = vadd.f32 %v2769, %v2732
          %v2786 = vadd.f32 %v2770, %v2734
          %v2787 = vadd.f32 %v2771, %v2478
          %v2788 = vadd.f32 %v2772, %v2480
          %v2789 = vadd.f32 %v2773, %v2564
          %v2790 = vadd.f32 %v2774, %v2566
          %v2791 = vadd.f32 %v2775, %v2650
          %v2792 = vadd.f32 %v2776, %v2652
          %v2793 = vadd.f32 %v2777, %v2736
          %v2794 = vadd.f32 %v2778, %v2738
          %2795 = vst [vmem:[#allocation3] sm:$0xff] %v2779
          %2796 = vst [vmem:[#allocation3 + $0x8] sm:$0xff] %v2780
          %2797 = vst [vmem:[#allocation3 + $0x10] sm:$0xff] %v2781
          %2798 = vst [vmem:[#allocation3 + $0x18] sm:$0xff] %v2782
          %2799 = vst [vmem:[#allocation3 + $0x20] sm:$0xff] %v2783
          %2800 = vst [vmem:[#allocation3 + $0x28] sm:$0xff] %v2784
          %2801 = vst [vmem:[#allocation3 + $0x30] sm:$0xff] %v2785
          %2802 = vst [vmem:[#allocation3 + $0x38] sm:$0xff] %v2786
          %2803 = vst [vmem:[#allocation3 + $0x40] sm:$0xff] %v2787
          %2804 = vst [vmem:[#allocation3 + $0x48] sm:$0xff] %v2788
          %2805 = vst [vmem:[#allocation3 + $0x50] sm:$0xff] %v2789
          %2806 = vst [vmem:[#allocation3 + $0x58] sm:$0xff] %v2790
          %2807 = vst [vmem:[#allocation3 + $0x60] sm:$0xff] %v2791
          %2808 = vst [vmem:[#allocation3 + $0x68] sm:$0xff] %v2792
          %2809 = vst [vmem:[#allocation3 + $0x70] sm:$0xff] %v2793
          %2810 = vst [vmem:[#allocation3 + $0x78] sm:$0xff] %v2794
        $region80: #{mi_estimator_forward.1} parent=47 // pred_fallthru
          _
        %p2811 = scmp.eq.s32.totalorder %s23, 1
        // Predicated region
        $region81: #{mi_estimator_forward.1} parent=47 // pred_check
          %p2812 = pneg %p2811
        $region82: #{mi_estimator_forward.1} parent=47 // pred_check_branch
          %2814 = sbr.rel (%p2812) target = $region84
        $region83: #{mi_estimator_forward.1} parent=47 // pred_region
          %v2815 = vld [vmem:[#allocation3] sm:$0xff]
          %v2816 = vld [vmem:[#allocation3 + $0x8] sm:$0xff]
          %v2817 = vld [vmem:[#allocation3 + $0x10] sm:$0xff]
          %v2818 = vld [vmem:[#allocation3 + $0x18] sm:$0xff]
          %v2819 = vld [vmem:[#allocation3 + $0x20] sm:$0xff]
          %v2820 = vld [vmem:[#allocation3 + $0x28] sm:$0xff]
          %v2821 = vld [vmem:[#allocation3 + $0x30] sm:$0xff]
          %v2822 = vld [vmem:[#allocation3 + $0x38] sm:$0xff]
          %v2823 = vld [vmem:[#allocation3 + $0x40] sm:$0xff]
          %v2824 = vld [vmem:[#allocation3 + $0x48] sm:$0xff]
          %v2825 = vld [vmem:[#allocation3 + $0x50] sm:$0xff]
          %v2826 = vld [vmem:[#allocation3 + $0x58] sm:$0xff]
          %v2827 = vld [vmem:[#allocation3 + $0x60] sm:$0xff]
          %v2828 = vld [vmem:[#allocation3 + $0x68] sm:$0xff]
          %v2829 = vld [vmem:[#allocation3 + $0x70] sm:$0xff]
          %v2830 = vld [vmem:[#allocation3 + $0x78] sm:$0xff]
          %v2831 = vld [vmem:[#allocation11] sm:$0xff]
          %v2833 = vlaneseq
          %v2834 = vshrl.u32 %v2833, 7
          %v2835 = vsub.s32 0, %v2834
          %v2836 = vrot.slane %v2831, %v2835
          %v2837 = vlaneseq
          %v2838 = vshrl.u32 %v2837, 7
          %v2839 = vsub.s32 1, %v2838
          %v2840 = vrot.slane %v2831, %v2839
          %v2841 = vlaneseq
          %v2842 = vshrl.u32 %v2841, 7
          %v2843 = vsub.s32 2, %v2842
          %v2844 = vrot.slane %v2831, %v2843
          %v2845 = vlaneseq
          %v2846 = vshrl.u32 %v2845, 7
          %v2847 = vsub.s32 3, %v2846
          %v2848 = vrot.slane %v2831, %v2847
          %v2849 = vlaneseq
          %v2850 = vshrl.u32 %v2849, 7
          %v2851 = vsub.s32 4, %v2850
          %v2852 = vrot.slane %v2831, %v2851
          %v2853 = vlaneseq
          %v2854 = vshrl.u32 %v2853, 7
          %v2855 = vsub.s32 5, %v2854
          %v2856 = vrot.slane %v2831, %v2855
          %v2857 = vlaneseq
          %v2858 = vshrl.u32 %v2857, 7
          %v2859 = vsub.s32 6, %v2858
          %v2860 = vrot.slane %v2831, %v2859
          %v2861 = vlaneseq
          %v2862 = vshrl.u32 %v2861, 7
          %v2863 = vsub.s32 7, %v2862
          %v2864 = vrot.slane %v2831, %v2863
          %v2873 = vadd.f32 %v2815, %v2836
          %v2874 = vadd.f32 %v2816, %v2840
          %v2875 = vadd.f32 %v2817, %v2844
          %v2876 = vadd.f32 %v2818, %v2848
          %v2877 = vadd.f32 %v2819, %v2852
          %v2878 = vadd.f32 %v2820, %v2856
          %v2879 = vadd.f32 %v2821, %v2860
          %v2880 = vadd.f32 %v2822, %v2864
          %v2881 = vadd.f32 %v2823, %v2836
          %v2882 = vadd.f32 %v2824, %v2840
          %v2883 = vadd.f32 %v2825, %v2844
          %v2884 = vadd.f32 %v2826, %v2848
          %v2885 = vadd.f32 %v2827, %v2852
          %v2886 = vadd.f32 %v2828, %v2856
          %v2887 = vadd.f32 %v2829, %v2860
          %v2888 = vadd.f32 %v2830, %v2864
          %v2889 = vmax.f32 %v2873, 0.0
          %v2890 = vmax.f32 %v2874, 0.0
          %v2891 = vmax.f32 %v2875, 0.0
          %v2892 = vmax.f32 %v2876, 0.0
          %v2893 = vmax.f32 %v2877, 0.0
          %v2894 = vmax.f32 %v2878, 0.0
          %v2895 = vmax.f32 %v2879, 0.0
          %v2896 = vmax.f32 %v2880, 0.0
          %v2897 = vmax.f32 %v2881, 0.0
          %v2898 = vmax.f32 %v2882, 0.0
          %v2899 = vmax.f32 %v2883, 0.0
          %v2900 = vmax.f32 %v2884, 0.0
          %v2901 = vmax.f32 %v2885, 0.0
          %v2902 = vmax.f32 %v2886, 0.0
          %v2903 = vmax.f32 %v2887, 0.0
          %v2904 = vmax.f32 %v2888, 0.0
          %v2905 = vld [vmem:[#allocation12] sm:$0xff]
          %v2907 = vlaneseq
          %v2908 = vshrl.u32 %v2907, 7
          %v2909 = vsub.s32 0, %v2908
          %v2910 = vrot.slane %v2905, %v2909
          %v2911 = vlaneseq
          %v2912 = vshrl.u32 %v2911, 7
          %v2913 = vsub.s32 1, %v2912
          %v2914 = vrot.slane %v2905, %v2913
          %v2915 = vlaneseq
          %v2916 = vshrl.u32 %v2915, 7
          %v2917 = vsub.s32 2, %v2916
          %v2918 = vrot.slane %v2905, %v2917
          %v2919 = vlaneseq
          %v2920 = vshrl.u32 %v2919, 7
          %v2921 = vsub.s32 3, %v2920
          %v2922 = vrot.slane %v2905, %v2921
          %v2923 = vlaneseq
          %v2924 = vshrl.u32 %v2923, 7
          %v2925 = vsub.s32 4, %v2924
          %v2926 = vrot.slane %v2905, %v2925
          %v2927 = vlaneseq
          %v2928 = vshrl.u32 %v2927, 7
          %v2929 = vsub.s32 5, %v2928
          %v2930 = vrot.slane %v2905, %v2929
          %v2931 = vlaneseq
          %v2932 = vshrl.u32 %v2931, 7
          %v2933 = vsub.s32 6, %v2932
          %v2934 = vrot.slane %v2905, %v2933
          %v2935 = vlaneseq
          %v2936 = vshrl.u32 %v2935, 7
          %v2937 = vsub.s32 7, %v2936
          %v2938 = vrot.slane %v2905, %v2937
          %v2947 = vmul.f32 %v2889, %v2910
          %v2948 = vmul.f32 %v2890, %v2914
          %v2949 = vmul.f32 %v2891, %v2918
          %v2950 = vmul.f32 %v2892, %v2922
          %v2951 = vmul.f32 %v2893, %v2926
          %v2952 = vmul.f32 %v2894, %v2930
          %v2953 = vmul.f32 %v2895, %v2934
          %v2954 = vmul.f32 %v2896, %v2938
          %v2955 = vmul.f32 %v2897, %v2910
          %v2956 = vmul.f32 %v2898, %v2914
          %v2957 = vmul.f32 %v2899, %v2918
          %v2958 = vmul.f32 %v2900, %v2922
          %v2959 = vmul.f32 %v2901, %v2926
          %v2960 = vmul.f32 %v2902, %v2930
          %v2961 = vmul.f32 %v2903, %v2934
          %v2962 = vmul.f32 %v2904, %v2938
          %v2963 = vadd.f32 %v2947, %v2948
          %v2964 = vadd.f32 %v2963, %v2949
          %v2965 = vadd.f32 %v2964, %v2950
          %v2966 = vadd.f32 %v2965, %v2951
          %v2967 = vadd.f32 %v2966, %v2952
          %v2968 = vadd.f32 %v2967, %v2953
          %v2969 = vadd.f32 %v2968, %v2954
          %2970 = vadd.xlane.f32.xlu0 %v2969
          %v2971 = vpop.xlane.xlu0 %2970
          %v2972 = vadd.f32 %v2955, %v2956
          %v2973 = vadd.f32 %v2972, %v2957
          %v2974 = vadd.f32 %v2973, %v2958
          %v2975 = vadd.f32 %v2974, %v2959
          %v2976 = vadd.f32 %v2975, %v2960
          %v2977 = vadd.f32 %v2976, %v2961
          %v2978 = vadd.f32 %v2977, %v2962
          %2979 = vadd.xlane.f32.xlu0 %v2978
          %v2980 = vpop.xlane.xlu0 %2979
          %s2981 = sld [smem:[#allocation4]]
          %v2982 = vstv %s2981
          %v2983 = vadd.f32 %v2971, %v2982
          %v2984 = vadd.f32 %v2980, %v2982
          %v2985 = vsub.f32 0.0, %v2983
          %v2986 = vmax.f32 %v2985, 0.0
          %v2987 = vand.u32 2147483647, %v2985
          %v2988 = vsub.f32 0.0, %v2987
          %v2989 = vmul.f32 %v2988, 1.442695
          %v2990 = vpow.pop %v2989
          %v2991 = vadd.f32 %v2990, 1.0
          %v2992 = vlog2.pop %v2991
          %v2993 = vmul.f32 %v2992, 0.6931472
          %v2994 = vadd.f32 %v2986, %v2993
          %vm2995 = vcmask 7168
          %v2996 = vsel %vm2995, %v2994, 0.0
          %2997 = vadd.xlane.f32.xlu0 %v2996
          %v2998 = vpop.xlane.xlu0 %2997
          %v2999 = vrot.slane %v2998, 4
          %v3000 = vadd.f32 %v2998, %v2999
          %v3001 = vrot.slane %v3000, 2
          %v3002 = vadd.f32 %v3000, %v3001
          %v3003 = vrot.slane %v3002, 1
          %v3004 = vadd.f32 %v3002, %v3003
          %s3005 = vtos %v3004
          %v3006 = vrcp.pop 8.0
          %s3007 = vtos %v3006
          %s3008 = smul.f32 %s3005, %s3007
          %s3009 = ssub.f32 0.0, %s3008
          %v3010 = vmax.f32 %v2984, 0.0
          %v3011 = vand.u32 2147483647, %v2984
          %v3012 = vsub.f32 0.0, %v3011
          %v3013 = vmul.f32 %v3012, 1.442695
          %v3014 = vpow.pop %v3013
          %v3015 = vadd.f32 %v3014, 1.0
          %v3016 = vlog2.pop %v3015
          %v3017 = vmul.f32 %v3016, 0.6931472
          %v3018 = vadd.f32 %v3010, %v3017
          %v3019 = vsel %vm2995, %v3018, 0.0
          %3020 = vadd.xlane.f32.xlu0 %v3019
          %v3021 = vpop.xlane.xlu0 %3020
          %v3022 = vrot.slane %v3021, 4
          %v3023 = vadd.f32 %v3021, %v3022
          %v3024 = vrot.slane %v3023, 2
          %v3025 = vadd.f32 %v3023, %v3024
          %v3026 = vrot.slane %v3025, 1
          %v3027 = vadd.f32 %v3025, %v3026
          %s3028 = vtos %v3027
          %v3029 = vrcp.pop 8.0
          %s3030 = vtos %v3029
          %s3031 = smul.f32 %s3028, %s3030
          %s3032 = ssub.f32 %s3009, %s3031
          %s3033 = scalar_lea.smem [#allocation14], 0
          %3034 = sst [smem:[%s3033]] %s3032
          %v3035 = vsel %vm2995, %v2983, 0.0
          %3036 = vadd.xlane.f32.xlu0 %v3035
          %v3037 = vpop.xlane.xlu0 %3036
          %v3038 = vrot.slane %v3037, 4
          %v3039 = vadd.f32 %v3037, %v3038
          %v3040 = vrot.slane %v3039, 2
          %v3041 = vadd.f32 %v3039, %v3040
          %v3042 = vrot.slane %v3041, 1
          %v3043 = vadd.f32 %v3041, %v3042
          %s3044 = vtos %v3043
          %v3045 = vrcp.pop 8.0
          %s3046 = vtos %v3045
          %s3047 = smul.f32 %s3044, %s3046
          %v3048 = vmul.f32 %v2984, 1.442695
          %v3049 = vpow.pop %v3048
          %v3050 = vsel %vm2995, %v3049, 0.0
          %3051 = vadd.xlane.f32.xlu0 %v3050
          %v3052 = vpop.xlane.xlu0 %3051
          %v3053 = vrot.slane %v3052, 4
          %v3054 = vadd.f32 %v3052, %v3053
          %v3055 = vrot.slane %v3054, 2
          %v3056 = vadd.f32 %v3054, %v3055
          %v3057 = vrot.slane %v3056, 1
          %v3058 = vadd.f32 %v3056, %v3057
          %s3059 = vtos %v3058
          %v3060 = vrcp.pop 8.0
          %s3061 = vtos %v3060
          %s3062 = smul.f32 %s3059, %s3061
          %s3063 = ssub.f32 %s3047, %s3062
          %s3064 = sadd.f32 %s3063, 1.0
          %s3065 = scalar_lea.smem [#allocation14], 1
          %3066 = sst [smem:[%s3065]] %s3064
        $region84: #{mi_estimator_forward.1} parent=47 // pred_fallthru
          _
        // Predicated region
        $region85: #{mi_estimator_forward.1} parent=47 // pred_check
          %p3067 = pneg %p188
        $region86: #{mi_estimator_forward.1} parent=47 // pred_check_branch
          %3069 = sbr.rel (%p3067) target = $region88
        $region87: #{mi_estimator_forward.1} parent=47 // pred_region
          %s3071 = ssub.s32 16, 16
          %3072 = vsyncadd [#allocation7], %s3071
          %s3074 = sshll.u32 %s7, 4
          %s3075 = int_to_ptr.vmem [resolvable:$true] %s3074
          %3077 = dma.smem_to_vmem [#allocation14], 16, %s3075, [#allocation7]
        $region88: #{mi_estimator_forward.1} parent=47 // pred_fallthru
          _
        // Predicated region
        $region89: #{mi_estimator_forward.1} parent=47 // pred_check
          %p3078 = pneg %p188
        $region90: #{mi_estimator_forward.1} parent=47 // pred_check_branch
          %3080 = sbr.rel (%p3078) target = $region92
        $region91: #{mi_estimator_forward.1} parent=47 // pred_region
          %3081 = dma.done [#allocation7], 16
        $region92: #{mi_estimator_forward.1} parent=47 // pred_fallthru
          _
        %3082 = sfence
      $region48: #{mi_estimator_forward.1} parent=5 // pred_fallthru
        _
      %p3083 = scmp.le.s32.totalorder 2, %s18
      // Predicated region
      $region93: #{mi_estimator_forward.1} parent=5 // pred_check
        %p3084 = pneg %p3083
      $region94: #{mi_estimator_forward.1} parent=5 // pred_check_branch
        %3086 = sbr.rel (%p3084) target = $region96
      $region95: #{mi_estimator_forward.1} parent=5 // pred_region
        %s3087 = ssub.s32 %s18, 2
      $region96: #{mi_estimator_forward.1} parent=5 // pred_fallthru
        _
    $region6: #{mi_estimator_forward.1} parent=1 // loop_footer
      %s22 = sadd.s32 1, %s18
    $region7: #{mi_estimator_forward.1} parent=1 // loop_footer_branch
      %17 = sbr.rel target = $region3
    $region8: #{mi_estimator_forward.1} parent=1 // loop_exit
      _
    %3088 = vsyncpa [#allocation6], 1
    %s3089 = scalar_lea.sflag [#allocation6], 1
    %3090 = vsyncpa %s3089, 1
    %3091 = vsyncpa [#allocation9], 1
    %3092 = vsyncpa [#allocation13], 1
    %3093 = vsyncpa [#allocation7], 1
    %s3094 = scalar_lea.sflag [#allocation7], 1
    %3095 = vsyncpa %s3094, 1

</llo_original>
